<compile_context>
chip_gen: v5e
topology: v5e:2x2
jax: 0.10.0
libtpu: 0.0.40
codegen_flags: <defaults>
</compile_context>

<pallas_src>
import jax
import jax.numpy as jnp
from jax import lax
from jax.experimental import pallas as pl
from jax.experimental.pallas import tpu as pltpu

IN_F, H1_F, H2_F, OUT_F = 10, 8, 4, 2
LANE = 128
CHUNK = 2048            # columns per inner-loop step
SUB = CHUNK // LANE     # 16 sublane-tiles: aligned for bf16 (16,128) and f32 (8,128)


def mlp_kernel(x_ref, w1_ref, b1_ref, w2_ref, b2_ref, w3_ref, b3_ref, o_ref):
    # x_ref: (10, T, 128) bf16 VMEM block, T = TB // 128 (multiple of 16)
    # w*/b*: f32 SMEM refs, read as scalars -> VPU broadcast-FMAs
    # o_ref: (2, T, 128) f32 VMEM block
    n_chunks = x_ref.shape[1] // SUB

    # Hoist the 120 weight + 14 bias scalar loads out of the chunk loop.
    w1 = [[w1_ref[j, k] for k in range(IN_F)] for j in range(H1_F)]
    b1 = [b1_ref[j] for j in range(H1_F)]
    w2 = [[w2_ref[j, k] for k in range(H1_F)] for j in range(H2_F)]
    b2 = [b2_ref[j] for j in range(H2_F)]
    w3 = [[w3_ref[j, k] for k in range(H2_F)] for j in range(OUT_F)]
    b3 = [b3_ref[j] for j in range(OUT_F)]

    def body(c, carry):
        r = pl.multiple_of(c * SUB, SUB)
        # One (SUB, 128) f32 slab per input feature: full, tile-aligned vregs.
        xr = [x_ref[k, pl.ds(r, SUB), :].astype(jnp.float32) for k in range(IN_F)]

        # Layer 1: 10 -> 8, ReLU  (all intermediates stay in vregs)
        h1 = []
        for j in range(H1_F):
            acc = w1[j][0] * xr[0]
            for k in range(1, IN_F):
                acc = acc + w1[j][k] * xr[k]
            h1.append(jnp.maximum(acc + b1[j], 0.0))

        # Layer 2: 8 -> 4, ReLU
        h2 = []
        for j in range(H2_F):
            acc = w2[j][0] * h1[0]
            for k in range(1, H1_F):
                acc = acc + w2[j][k] * h1[k]
            h2.append(jnp.maximum(acc + b2[j], 0.0))

        # Layer 3: 4 -> 2, lane-dense unmasked stores
        for j in range(OUT_F):
            acc = w3[j][0] * h2[0]
            for k in range(1, H2_F):
                acc = acc + w3[j][k] * h2[k]
            o_ref[j, pl.ds(r, SUB), :] = acc + b3[j]
        return carry

    lax.fori_loop(0, n_chunks, body, 0)


def _round_up(n, m):
    return ((n + m - 1) // m) * m


def net_10_2_forward(x, params, *, tb_target=32768):
    """x: (B, 10) f32 -> (B, 2) f32."""
    w1, b1, w2, b2, w3, b3 = params
    B = x.shape[0]
    assert tb_target % CHUNK == 0

    # Pad the batch only to a CHUNK multiple (not to a TB multiple); Pallas
    # clips partial final grid blocks on its own.
    B_pad = _round_up(max(B, CHUNK), CHUNK)
    TB = min(tb_target, B_pad)
    n_tiles = B_pad // LANE
    tb_tiles = TB // LANE

    # Batch-on-lanes transport layout: (10, B_pad/128, 128) bf16.
    # allow_input_fusion below lets XLA fold this transpose/cast/pad/reshape
    # into the kernel's operand read instead of extra HBM passes.
    xt = x.astype(jnp.bfloat16).T
    if B_pad != B:
        xt = jnp.pad(xt, ((0, 0), (0, B_pad - B)))
    x3 = xt.reshape(IN_F, n_tiles, LANE)

    smem = pl.BlockSpec(memory_space=pltpu.MemorySpace.SMEM)
    out3 = pl.pallas_call(
        mlp_kernel,
        out_shape=jax.ShapeDtypeStruct((OUT_F, n_tiles, LANE), jnp.float32),
        grid_spec=pl.GridSpec(
            grid=(pl.cdiv(n_tiles, tb_tiles),),
            in_specs=[pl.BlockSpec((IN_F, tb_tiles, LANE), lambda i: (0, i, 0)),
                      smem, smem, smem, smem, smem, smem],
            out_specs=pl.BlockSpec((OUT_F, tb_tiles, LANE), lambda i: (0, i, 0)),
        ),
        compiler_params=pltpu.CompilerParams(
            dimension_semantics=("parallel",),
            allow_input_fusion=[True, False, False, False, False, False, False],
        ),
    )(x3, w1, b1, w2, b2, w3, b3)

    out = out3.reshape(OUT_F, B_pad)[:, :B]
    return out.T                                       # (B, 2)


def init_params(key):
    """nn.Linear-style U(-1/sqrt(fan_in), +1/sqrt(fan_in)) init, all f32.
    Weights stored as (out, in); biases as (out,)."""
    def linear(key, fan_in, fan_out):
        kw, kb = jax.random.split(key)
        bound = 1.0 / jnp.sqrt(float(fan_in))
        w = jax.random.uniform(kw, (fan_out, fan_in), jnp.float32, -bound, bound)
        b = jax.random.uniform(kb, (fan_out,), jnp.float32, -bound, bound)
        return w, b

    k1, k2, k3 = jax.random.split(key, 3)
    w1, b1 = linear(k1, IN_F, H1_F)
    w2, b2 = linear(k2, H1_F, H2_F)
    w3, b3 = linear(k3, H2_F, OUT_F)
    return (w1, b1, w2, b2, w3, b3)


def reference_forward(x, params):
    """Plain-JAX reference with the same math as the kernel: x quantized to
    bf16 for transport, all compute in f32."""
    w1, b1, w2, b2, w3, b3 = params
    hp = jax.lax.Precision.HIGHEST
    xq = x.astype(jnp.bfloat16).astype(jnp.float32)
    h1 = jnp.maximum(jnp.dot(xq, w1.T, precision=hp) + b1, 0.0)
    h2 = jnp.maximum(jnp.dot(h1, w2.T, precision=hp) + b2, 0.0)
    return jnp.dot(h2, w3.T, precision=hp) + b3


if __name__ == "__main__":
    key = jax.random.PRNGKey(0)
    k_params, k_x1, k_x2 = jax.random.split(key, 3)
    params = init_params(k_params)

    # Small case (single grid step, single inner chunk).
    B = 8
    x = jax.random.normal(k_x1, (B, IN_F), jnp.float32)
    out = jax.block_until_ready(net_10_2_forward(x, params))
    ref = reference_forward(x, params)
    assert out.shape == (B, OUT_F)
    assert jnp.allclose(out, ref, atol=1e-4, rtol=1e-4), \
        float(jnp.max(jnp.abs(out - ref)))

    # Larger case: exercises multi-chunk inner loop + batch-tail padding.
    B2 = 2500
    x2 = jax.random.normal(k_x2, (B2, IN_F), jnp.float32)
    out2 = jax.block_until_ready(net_10_2_forward(x2, params))
    ref2 = reference_forward(x2, params)
    assert out2.shape == (B2, OUT_F)
    assert jnp.allclose(out2, ref2, atol=1e-4, rtol=1e-4), \
        float(jnp.max(jnp.abs(out2 - ref2)))

    print("KERNEL_OK")
</pallas_src>

<mosaic_0001>
module attributes {stable_mosaic.version = 11 : i64} {
  func.func @mlp_kernel(%arg0: i32, %arg1: memref<10x16x128xbf16, #tpu.memory_space<vmem>>, %arg2: memref<8x10xf32, #tpu.memory_space<smem>>, %arg3: memref<8xf32, #tpu.memory_space<smem>>, %arg4: memref<4x8xf32, #tpu.memory_space<smem>>, %arg5: memref<4xf32, #tpu.memory_space<smem>>, %arg6: memref<2x4xf32, #tpu.memory_space<smem>>, %arg7: memref<2xf32, #tpu.memory_space<smem>>, %arg8: memref<2x16x128xf32, #tpu.memory_space<vmem>>) attributes {dimension_semantics = [#tpu.dimension_semantics<parallel>], iteration_bounds = array<i64: 1>, scalar_prefetch = 0 : i64, scratch_operands = 0 : i64, tpu.core_type = #tpu.core_type<tc>, window_params = [{transform_indices = @transform_0, window_bounds = array<i64: 10, 16, 128>}, {transform_indices = @transform_1, window_bounds = array<i64: 8, 10>}, {transform_indices = @transform_2, window_bounds = array<i64: 8>}, {transform_indices = @transform_3, window_bounds = array<i64: 4, 8>}, {transform_indices = @transform_4, window_bounds = array<i64: 4>}, {transform_indices = @transform_5, window_bounds = array<i64: 2, 4>}, {transform_indices = @transform_6, window_bounds = array<i64: 2>}, {transform_indices = @transform_7, window_bounds = array<i64: 2, 16, 128>}]} {
    %c0 = arith.constant 0 : index
    %c0_0 = arith.constant 0 : index
    %0 = memref.load %arg2[%c0, %c0_0] : memref<8x10xf32, #tpu.memory_space<smem>>
    %c0_1 = arith.constant 0 : index
    %c1 = arith.constant 1 : index
    %1 = memref.load %arg2[%c0_1, %c1] : memref<8x10xf32, #tpu.memory_space<smem>>
    %c0_2 = arith.constant 0 : index
    %c2 = arith.constant 2 : index
    %2 = memref.load %arg2[%c0_2, %c2] : memref<8x10xf32, #tpu.memory_space<smem>>
    %c0_3 = arith.constant 0 : index
    %c3 = arith.constant 3 : index
    %3 = memref.load %arg2[%c0_3, %c3] : memref<8x10xf32, #tpu.memory_space<smem>>
    %c0_4 = arith.constant 0 : index
    %c4 = arith.constant 4 : index
    %4 = memref.load %arg2[%c0_4, %c4] : memref<8x10xf32, #tpu.memory_space<smem>>
    %c0_5 = arith.constant 0 : index
    %c5 = arith.constant 5 : index
    %5 = memref.load %arg2[%c0_5, %c5] : memref<8x10xf32, #tpu.memory_space<smem>>
    %c0_6 = arith.constant 0 : index
    %c6 = arith.constant 6 : index
    %6 = memref.load %arg2[%c0_6, %c6] : memref<8x10xf32, #tpu.memory_space<smem>>
    %c0_7 = arith.constant 0 : index
    %c7 = arith.constant 7 : index
    %7 = memref.load %arg2[%c0_7, %c7] : memref<8x10xf32, #tpu.memory_space<smem>>
    %c0_8 = arith.constant 0 : index
    %c8 = arith.constant 8 : index
    %8 = memref.load %arg2[%c0_8, %c8] : memref<8x10xf32, #tpu.memory_space<smem>>
    %c0_9 = arith.constant 0 : index
    %c9 = arith.constant 9 : index
    %9 = memref.load %arg2[%c0_9, %c9] : memref<8x10xf32, #tpu.memory_space<smem>>
    %c1_10 = arith.constant 1 : index
    %c0_11 = arith.constant 0 : index
    %10 = memref.load %arg2[%c1_10, %c0_11] : memref<8x10xf32, #tpu.memory_space<smem>>
    %c1_12 = arith.constant 1 : index
    %c1_13 = arith.constant 1 : index
    %11 = memref.load %arg2[%c1_12, %c1_13] : memref<8x10xf32, #tpu.memory_space<smem>>
    %c1_14 = arith.constant 1 : index
    %c2_15 = arith.constant 2 : index
    %12 = memref.load %arg2[%c1_14, %c2_15] : memref<8x10xf32, #tpu.memory_space<smem>>
    %c1_16 = arith.constant 1 : index
    %c3_17 = arith.constant 3 : index
    %13 = memref.load %arg2[%c1_16, %c3_17] : memref<8x10xf32, #tpu.memory_space<smem>>
    %c1_18 = arith.constant 1 : index
    %c4_19 = arith.constant 4 : index
    %14 = memref.load %arg2[%c1_18, %c4_19] : memref<8x10xf32, #tpu.memory_space<smem>>
    %c1_20 = arith.constant 1 : index
    %c5_21 = arith.constant 5 : index
    %15 = memref.load %arg2[%c1_20, %c5_21] : memref<8x10xf32, #tpu.memory_space<smem>>
    %c1_22 = arith.constant 1 : index
    %c6_23 = arith.constant 6 : index
    %16 = memref.load %arg2[%c1_22, %c6_23] : memref<8x10xf32, #tpu.memory_space<smem>>
    %c1_24 = arith.constant 1 : index
    %c7_25 = arith.constant 7 : index
    %17 = memref.load %arg2[%c1_24, %c7_25] : memref<8x10xf32, #tpu.memory_space<smem>>
    %c1_26 = arith.constant 1 : index
    %c8_27 = arith.constant 8 : index
    %18 = memref.load %arg2[%c1_26, %c8_27] : memref<8x10xf32, #tpu.memory_space<smem>>
    %c1_28 = arith.constant 1 : index
    %c9_29 = arith.constant 9 : index
    %19 = memref.load %arg2[%c1_28, %c9_29] : memref<8x10xf32, #tpu.memory_space<smem>>
    %c2_30 = arith.constant 2 : index
    %c0_31 = arith.constant 0 : index
    %20 = memref.load %arg2[%c2_30, %c0_31] : memref<8x10xf32, #tpu.memory_space<smem>>
    %c2_32 = arith.constant 2 : index
    %c1_33 = arith.constant 1 : index
    %21 = memref.load %arg2[%c2_32, %c1_33] : memref<8x10xf32, #tpu.memory_space<smem>>
    %c2_34 = arith.constant 2 : index
    %c2_35 = arith.constant 2 : index
    %22 = memref.load %arg2[%c2_34, %c2_35] : memref<8x10xf32, #tpu.memory_space<smem>>
    %c2_36 = arith.constant 2 : index
    %c3_37 = arith.constant 3 : index
    %23 = memref.load %arg2[%c2_36, %c3_37] : memref<8x10xf32, #tpu.memory_space<smem>>
    %c2_38 = arith.constant 2 : index
    %c4_39 = arith.constant 4 : index
    %24 = memref.load %arg2[%c2_38, %c4_39] : memref<8x10xf32, #tpu.memory_space<smem>>
    %c2_40 = arith.constant 2 : index
    %c5_41 = arith.constant 5 : index
    %25 = memref.load %arg2[%c2_40, %c5_41] : memref<8x10xf32, #tpu.memory_space<smem>>
    %c2_42 = arith.constant 2 : index
    %c6_43 = arith.constant 6 : index
    %26 = memref.load %arg2[%c2_42, %c6_43] : memref<8x10xf32, #tpu.memory_space<smem>>
    %c2_44 = arith.constant 2 : index
    %c7_45 = arith.constant 7 : index
    %27 = memref.load %arg2[%c2_44, %c7_45] : memref<8x10xf32, #tpu.memory_space<smem>>
    %c2_46 = arith.constant 2 : index
    %c8_47 = arith.constant 8 : index
    %28 = memref.load %arg2[%c2_46, %c8_47] : memref<8x10xf32, #tpu.memory_space<smem>>
    %c2_48 = arith.constant 2 : index
    %c9_49 = arith.constant 9 : index
    %29 = memref.load %arg2[%c2_48, %c9_49] : memref<8x10xf32, #tpu.memory_space<smem>>
    %c3_50 = arith.constant 3 : index
    %c0_51 = arith.constant 0 : index
    %30 = memref.load %arg2[%c3_50, %c0_51] : memref<8x10xf32, #tpu.memory_space<smem>>
    %c3_52 = arith.constant 3 : index
    %c1_53 = arith.constant 1 : index
    %31 = memref.load %arg2[%c3_52, %c1_53] : memref<8x10xf32, #tpu.memory_space<smem>>
    %c3_54 = arith.constant 3 : index
    %c2_55 = arith.constant 2 : index
    %32 = memref.load %arg2[%c3_54, %c2_55] : memref<8x10xf32, #tpu.memory_space<smem>>
    %c3_56 = arith.constant 3 : index
    %c3_57 = arith.constant 3 : index
    %33 = memref.load %arg2[%c3_56, %c3_57] : memref<8x10xf32, #tpu.memory_space<smem>>
    %c3_58 = arith.constant 3 : index
    %c4_59 = arith.constant 4 : index
    %34 = memref.load %arg2[%c3_58, %c4_59] : memref<8x10xf32, #tpu.memory_space<smem>>
    %c3_60 = arith.constant 3 : index
    %c5_61 = arith.constant 5 : index
    %35 = memref.load %arg2[%c3_60, %c5_61] : memref<8x10xf32, #tpu.memory_space<smem>>
    %c3_62 = arith.constant 3 : index
    %c6_63 = arith.constant 6 : index
    %36 = memref.load %arg2[%c3_62, %c6_63] : memref<8x10xf32, #tpu.memory_space<smem>>
    %c3_64 = arith.constant 3 : index
    %c7_65 = arith.constant 7 : index
    %37 = memref.load %arg2[%c3_64, %c7_65] : memref<8x10xf32, #tpu.memory_space<smem>>
    %c3_66 = arith.constant 3 : index
    %c8_67 = arith.constant 8 : index
    %38 = memref.load %arg2[%c3_66, %c8_67] : memref<8x10xf32, #tpu.memory_space<smem>>
    %c3_68 = arith.constant 3 : index
    %c9_69 = arith.constant 9 : index
    %39 = memref.load %arg2[%c3_68, %c9_69] : memref<8x10xf32, #tpu.memory_space<smem>>
    %c4_70 = arith.constant 4 : index
    %c0_71 = arith.constant 0 : index
    %40 = memref.load %arg2[%c4_70, %c0_71] : memref<8x10xf32, #tpu.memory_space<smem>>
    %c4_72 = arith.constant 4 : index
    %c1_73 = arith.constant 1 : index
    %41 = memref.load %arg2[%c4_72, %c1_73] : memref<8x10xf32, #tpu.memory_space<smem>>
    %c4_74 = arith.constant 4 : index
    %c2_75 = arith.constant 2 : index
    %42 = memref.load %arg2[%c4_74, %c2_75] : memref<8x10xf32, #tpu.memory_space<smem>>
    %c4_76 = arith.constant 4 : index
    %c3_77 = arith.constant 3 : index
    %43 = memref.load %arg2[%c4_76, %c3_77] : memref<8x10xf32, #tpu.memory_space<smem>>
    %c4_78 = arith.constant 4 : index
    %c4_79 = arith.constant 4 : index
    %44 = memref.load %arg2[%c4_78, %c4_79] : memref<8x10xf32, #tpu.memory_space<smem>>
    %c4_80 = arith.constant 4 : index
    %c5_81 = arith.constant 5 : index
    %45 = memref.load %arg2[%c4_80, %c5_81] : memref<8x10xf32, #tpu.memory_space<smem>>
    %c4_82 = arith.constant 4 : index
    %c6_83 = arith.constant 6 : index
    %46 = memref.load %arg2[%c4_82, %c6_83] : memref<8x10xf32, #tpu.memory_space<smem>>
    %c4_84 = arith.constant 4 : index
    %c7_85 = arith.constant 7 : index
    %47 = memref.load %arg2[%c4_84, %c7_85] : memref<8x10xf32, #tpu.memory_space<smem>>
    %c4_86 = arith.constant 4 : index
    %c8_87 = arith.constant 8 : index
    %48 = memref.load %arg2[%c4_86, %c8_87] : memref<8x10xf32, #tpu.memory_space<smem>>
    %c4_88 = arith.constant 4 : index
    %c9_89 = arith.constant 9 : index
    %49 = memref.load %arg2[%c4_88, %c9_89] : memref<8x10xf32, #tpu.memory_space<smem>>
    %c5_90 = arith.constant 5 : index
    %c0_91 = arith.constant 0 : index
    %50 = memref.load %arg2[%c5_90, %c0_91] : memref<8x10xf32, #tpu.memory_space<smem>>
    %c5_92 = arith.constant 5 : index
    %c1_93 = arith.constant 1 : index
    %51 = memref.load %arg2[%c5_92, %c1_93] : memref<8x10xf32, #tpu.memory_space<smem>>
    %c5_94 = arith.constant 5 : index
    %c2_95 = arith.constant 2 : index
    %52 = memref.load %arg2[%c5_94, %c2_95] : memref<8x10xf32, #tpu.memory_space<smem>>
    %c5_96 = arith.constant 5 : index
    %c3_97 = arith.constant 3 : index
    %53 = memref.load %arg2[%c5_96, %c3_97] : memref<8x10xf32, #tpu.memory_space<smem>>
    %c5_98 = arith.constant 5 : index
    %c4_99 = arith.constant 4 : index
    %54 = memref.load %arg2[%c5_98, %c4_99] : memref<8x10xf32, #tpu.memory_space<smem>>
    %c5_100 = arith.constant 5 : index
    %c5_101 = arith.constant 5 : index
    %55 = memref.load %arg2[%c5_100, %c5_101] : memref<8x10xf32, #tpu.memory_space<smem>>
    %c5_102 = arith.constant 5 : index
    %c6_103 = arith.constant 6 : index
    %56 = memref.load %arg2[%c5_102, %c6_103] : memref<8x10xf32, #tpu.memory_space<smem>>
    %c5_104 = arith.constant 5 : index
    %c7_105 = arith.constant 7 : index
    %57 = memref.load %arg2[%c5_104, %c7_105] : memref<8x10xf32, #tpu.memory_space<smem>>
    %c5_106 = arith.constant 5 : index
    %c8_107 = arith.constant 8 : index
    %58 = memref.load %arg2[%c5_106, %c8_107] : memref<8x10xf32, #tpu.memory_space<smem>>
    %c5_108 = arith.constant 5 : index
    %c9_109 = arith.constant 9 : index
    %59 = memref.load %arg2[%c5_108, %c9_109] : memref<8x10xf32, #tpu.memory_space<smem>>
    %c6_110 = arith.constant 6 : index
    %c0_111 = arith.constant 0 : index
    %60 = memref.load %arg2[%c6_110, %c0_111] : memref<8x10xf32, #tpu.memory_space<smem>>
    %c6_112 = arith.constant 6 : index
    %c1_113 = arith.constant 1 : index
    %61 = memref.load %arg2[%c6_112, %c1_113] : memref<8x10xf32, #tpu.memory_space<smem>>
    %c6_114 = arith.constant 6 : index
    %c2_115 = arith.constant 2 : index
    %62 = memref.load %arg2[%c6_114, %c2_115] : memref<8x10xf32, #tpu.memory_space<smem>>
    %c6_116 = arith.constant 6 : index
    %c3_117 = arith.constant 3 : index
    %63 = memref.load %arg2[%c6_116, %c3_117] : memref<8x10xf32, #tpu.memory_space<smem>>
    %c6_118 = arith.constant 6 : index
    %c4_119 = arith.constant 4 : index
    %64 = memref.load %arg2[%c6_118, %c4_119] : memref<8x10xf32, #tpu.memory_space<smem>>
    %c6_120 = arith.constant 6 : index
    %c5_121 = arith.constant 5 : index
    %65 = memref.load %arg2[%c6_120, %c5_121] : memref<8x10xf32, #tpu.memory_space<smem>>
    %c6_122 = arith.constant 6 : index
    %c6_123 = arith.constant 6 : index
    %66 = memref.load %arg2[%c6_122, %c6_123] : memref<8x10xf32, #tpu.memory_space<smem>>
    %c6_124 = arith.constant 6 : index
    %c7_125 = arith.constant 7 : index
    %67 = memref.load %arg2[%c6_124, %c7_125] : memref<8x10xf32, #tpu.memory_space<smem>>
    %c6_126 = arith.constant 6 : index
    %c8_127 = arith.constant 8 : index
    %68 = memref.load %arg2[%c6_126, %c8_127] : memref<8x10xf32, #tpu.memory_space<smem>>
    %c6_128 = arith.constant 6 : index
    %c9_129 = arith.constant 9 : index
    %69 = memref.load %arg2[%c6_128, %c9_129] : memref<8x10xf32, #tpu.memory_space<smem>>
    %c7_130 = arith.constant 7 : index
    %c0_131 = arith.constant 0 : index
    %70 = memref.load %arg2[%c7_130, %c0_131] : memref<8x10xf32, #tpu.memory_space<smem>>
    %c7_132 = arith.constant 7 : index
    %c1_133 = arith.constant 1 : index
    %71 = memref.load %arg2[%c7_132, %c1_133] : memref<8x10xf32, #tpu.memory_space<smem>>
    %c7_134 = arith.constant 7 : index
    %c2_135 = arith.constant 2 : index
    %72 = memref.load %arg2[%c7_134, %c2_135] : memref<8x10xf32, #tpu.memory_space<smem>>
    %c7_136 = arith.constant 7 : index
    %c3_137 = arith.constant 3 : index
    %73 = memref.load %arg2[%c7_136, %c3_137] : memref<8x10xf32, #tpu.memory_space<smem>>
    %c7_138 = arith.constant 7 : index
    %c4_139 = arith.constant 4 : index
    %74 = memref.load %arg2[%c7_138, %c4_139] : memref<8x10xf32, #tpu.memory_space<smem>>
    %c7_140 = arith.constant 7 : index
    %c5_141 = arith.constant 5 : index
    %75 = memref.load %arg2[%c7_140, %c5_141] : memref<8x10xf32, #tpu.memory_space<smem>>
    %c7_142 = arith.constant 7 : index
    %c6_143 = arith.constant 6 : index
    %76 = memref.load %arg2[%c7_142, %c6_143] : memref<8x10xf32, #tpu.memory_space<smem>>
    %c7_144 = arith.constant 7 : index
    %c7_145 = arith.constant 7 : index
    %77 = memref.load %arg2[%c7_144, %c7_145] : memref<8x10xf32, #tpu.memory_space<smem>>
    %c7_146 = arith.constant 7 : index
    %c8_147 = arith.constant 8 : index
    %78 = memref.load %arg2[%c7_146, %c8_147] : memref<8x10xf32, #tpu.memory_space<smem>>
    %c7_148 = arith.constant 7 : index
    %c9_149 = arith.constant 9 : index
    %79 = memref.load %arg2[%c7_148, %c9_149] : memref<8x10xf32, #tpu.memory_space<smem>>
    %c0_150 = arith.constant 0 : index
    %80 = memref.load %arg3[%c0_150] : memref<8xf32, #tpu.memory_space<smem>>
    %c1_151 = arith.constant 1 : index
    %81 = memref.load %arg3[%c1_151] : memref<8xf32, #tpu.memory_space<smem>>
    %c2_152 = arith.constant 2 : index
    %82 = memref.load %arg3[%c2_152] : memref<8xf32, #tpu.memory_space<smem>>
    %c3_153 = arith.constant 3 : index
    %83 = memref.load %arg3[%c3_153] : memref<8xf32, #tpu.memory_space<smem>>
    %c4_154 = arith.constant 4 : index
    %84 = memref.load %arg3[%c4_154] : memref<8xf32, #tpu.memory_space<smem>>
    %c5_155 = arith.constant 5 : index
    %85 = memref.load %arg3[%c5_155] : memref<8xf32, #tpu.memory_space<smem>>
    %c6_156 = arith.constant 6 : index
    %86 = memref.load %arg3[%c6_156] : memref<8xf32, #tpu.memory_space<smem>>
    %c7_157 = arith.constant 7 : index
    %87 = memref.load %arg3[%c7_157] : memref<8xf32, #tpu.memory_space<smem>>
    %c0_158 = arith.constant 0 : index
    %c0_159 = arith.constant 0 : index
    %88 = memref.load %arg4[%c0_158, %c0_159] : memref<4x8xf32, #tpu.memory_space<smem>>
    %c0_160 = arith.constant 0 : index
    %c1_161 = arith.constant 1 : index
    %89 = memref.load %arg4[%c0_160, %c1_161] : memref<4x8xf32, #tpu.memory_space<smem>>
    %c0_162 = arith.constant 0 : index
    %c2_163 = arith.constant 2 : index
    %90 = memref.load %arg4[%c0_162, %c2_163] : memref<4x8xf32, #tpu.memory_space<smem>>
    %c0_164 = arith.constant 0 : index
    %c3_165 = arith.constant 3 : index
    %91 = memref.load %arg4[%c0_164, %c3_165] : memref<4x8xf32, #tpu.memory_space<smem>>
    %c0_166 = arith.constant 0 : index
    %c4_167 = arith.constant 4 : index
    %92 = memref.load %arg4[%c0_166, %c4_167] : memref<4x8xf32, #tpu.memory_space<smem>>
    %c0_168 = arith.constant 0 : index
    %c5_169 = arith.constant 5 : index
    %93 = memref.load %arg4[%c0_168, %c5_169] : memref<4x8xf32, #tpu.memory_space<smem>>
    %c0_170 = arith.constant 0 : index
    %c6_171 = arith.constant 6 : index
    %94 = memref.load %arg4[%c0_170, %c6_171] : memref<4x8xf32, #tpu.memory_space<smem>>
    %c0_172 = arith.constant 0 : index
    %c7_173 = arith.constant 7 : index
    %95 = memref.load %arg4[%c0_172, %c7_173] : memref<4x8xf32, #tpu.memory_space<smem>>
    %c1_174 = arith.constant 1 : index
    %c0_175 = arith.constant 0 : index
    %96 = memref.load %arg4[%c1_174, %c0_175] : memref<4x8xf32, #tpu.memory_space<smem>>
    %c1_176 = arith.constant 1 : index
    %c1_177 = arith.constant 1 : index
    %97 = memref.load %arg4[%c1_176, %c1_177] : memref<4x8xf32, #tpu.memory_space<smem>>
    %c1_178 = arith.constant 1 : index
    %c2_179 = arith.constant 2 : index
    %98 = memref.load %arg4[%c1_178, %c2_179] : memref<4x8xf32, #tpu.memory_space<smem>>
    %c1_180 = arith.constant 1 : index
    %c3_181 = arith.constant 3 : index
    %99 = memref.load %arg4[%c1_180, %c3_181] : memref<4x8xf32, #tpu.memory_space<smem>>
    %c1_182 = arith.constant 1 : index
    %c4_183 = arith.constant 4 : index
    %100 = memref.load %arg4[%c1_182, %c4_183] : memref<4x8xf32, #tpu.memory_space<smem>>
    %c1_184 = arith.constant 1 : index
    %c5_185 = arith.constant 5 : index
    %101 = memref.load %arg4[%c1_184, %c5_185] : memref<4x8xf32, #tpu.memory_space<smem>>
    %c1_186 = arith.constant 1 : index
    %c6_187 = arith.constant 6 : index
    %102 = memref.load %arg4[%c1_186, %c6_187] : memref<4x8xf32, #tpu.memory_space<smem>>
    %c1_188 = arith.constant 1 : index
    %c7_189 = arith.constant 7 : index
    %103 = memref.load %arg4[%c1_188, %c7_189] : memref<4x8xf32, #tpu.memory_space<smem>>
    %c2_190 = arith.constant 2 : index
    %c0_191 = arith.constant 0 : index
    %104 = memref.load %arg4[%c2_190, %c0_191] : memref<4x8xf32, #tpu.memory_space<smem>>
    %c2_192 = arith.constant 2 : index
    %c1_193 = arith.constant 1 : index
    %105 = memref.load %arg4[%c2_192, %c1_193] : memref<4x8xf32, #tpu.memory_space<smem>>
    %c2_194 = arith.constant 2 : index
    %c2_195 = arith.constant 2 : index
    %106 = memref.load %arg4[%c2_194, %c2_195] : memref<4x8xf32, #tpu.memory_space<smem>>
    %c2_196 = arith.constant 2 : index
    %c3_197 = arith.constant 3 : index
    %107 = memref.load %arg4[%c2_196, %c3_197] : memref<4x8xf32, #tpu.memory_space<smem>>
    %c2_198 = arith.constant 2 : index
    %c4_199 = arith.constant 4 : index
    %108 = memref.load %arg4[%c2_198, %c4_199] : memref<4x8xf32, #tpu.memory_space<smem>>
    %c2_200 = arith.constant 2 : index
    %c5_201 = arith.constant 5 : index
    %109 = memref.load %arg4[%c2_200, %c5_201] : memref<4x8xf32, #tpu.memory_space<smem>>
    %c2_202 = arith.constant 2 : index
    %c6_203 = arith.constant 6 : index
    %110 = memref.load %arg4[%c2_202, %c6_203] : memref<4x8xf32, #tpu.memory_space<smem>>
    %c2_204 = arith.constant 2 : index
    %c7_205 = arith.constant 7 : index
    %111 = memref.load %arg4[%c2_204, %c7_205] : memref<4x8xf32, #tpu.memory_space<smem>>
    %c3_206 = arith.constant 3 : index
    %c0_207 = arith.constant 0 : index
    %112 = memref.load %arg4[%c3_206, %c0_207] : memref<4x8xf32, #tpu.memory_space<smem>>
    %c3_208 = arith.constant 3 : index
    %c1_209 = arith.constant 1 : index
    %113 = memref.load %arg4[%c3_208, %c1_209] : memref<4x8xf32, #tpu.memory_space<smem>>
    %c3_210 = arith.constant 3 : index
    %c2_211 = arith.constant 2 : index
    %114 = memref.load %arg4[%c3_210, %c2_211] : memref<4x8xf32, #tpu.memory_space<smem>>
    %c3_212 = arith.constant 3 : index
    %c3_213 = arith.constant 3 : index
    %115 = memref.load %arg4[%c3_212, %c3_213] : memref<4x8xf32, #tpu.memory_space<smem>>
    %c3_214 = arith.constant 3 : index
    %c4_215 = arith.constant 4 : index
    %116 = memref.load %arg4[%c3_214, %c4_215] : memref<4x8xf32, #tpu.memory_space<smem>>
    %c3_216 = arith.constant 3 : index
    %c5_217 = arith.constant 5 : index
    %117 = memref.load %arg4[%c3_216, %c5_217] : memref<4x8xf32, #tpu.memory_space<smem>>
    %c3_218 = arith.constant 3 : index
    %c6_219 = arith.constant 6 : index
    %118 = memref.load %arg4[%c3_218, %c6_219] : memref<4x8xf32, #tpu.memory_space<smem>>
    %c3_220 = arith.constant 3 : index
    %c7_221 = arith.constant 7 : index
    %119 = memref.load %arg4[%c3_220, %c7_221] : memref<4x8xf32, #tpu.memory_space<smem>>
    %c0_222 = arith.constant 0 : index
    %120 = memref.load %arg5[%c0_222] : memref<4xf32, #tpu.memory_space<smem>>
    %c1_223 = arith.constant 1 : index
    %121 = memref.load %arg5[%c1_223] : memref<4xf32, #tpu.memory_space<smem>>
    %c2_224 = arith.constant 2 : index
    %122 = memref.load %arg5[%c2_224] : memref<4xf32, #tpu.memory_space<smem>>
    %c3_225 = arith.constant 3 : index
    %123 = memref.load %arg5[%c3_225] : memref<4xf32, #tpu.memory_space<smem>>
    %c0_226 = arith.constant 0 : index
    %c0_227 = arith.constant 0 : index
    %124 = memref.load %arg6[%c0_226, %c0_227] : memref<2x4xf32, #tpu.memory_space<smem>>
    %c0_228 = arith.constant 0 : index
    %c1_229 = arith.constant 1 : index
    %125 = memref.load %arg6[%c0_228, %c1_229] : memref<2x4xf32, #tpu.memory_space<smem>>
    %c0_230 = arith.constant 0 : index
    %c2_231 = arith.constant 2 : index
    %126 = memref.load %arg6[%c0_230, %c2_231] : memref<2x4xf32, #tpu.memory_space<smem>>
    %c0_232 = arith.constant 0 : index
    %c3_233 = arith.constant 3 : index
    %127 = memref.load %arg6[%c0_232, %c3_233] : memref<2x4xf32, #tpu.memory_space<smem>>
    %c1_234 = arith.constant 1 : index
    %c0_235 = arith.constant 0 : index
    %128 = memref.load %arg6[%c1_234, %c0_235] : memref<2x4xf32, #tpu.memory_space<smem>>
    %c1_236 = arith.constant 1 : index
    %c1_237 = arith.constant 1 : index
    %129 = memref.load %arg6[%c1_236, %c1_237] : memref<2x4xf32, #tpu.memory_space<smem>>
    %c1_238 = arith.constant 1 : index
    %c2_239 = arith.constant 2 : index
    %130 = memref.load %arg6[%c1_238, %c2_239] : memref<2x4xf32, #tpu.memory_space<smem>>
    %c1_240 = arith.constant 1 : index
    %c3_241 = arith.constant 3 : index
    %131 = memref.load %arg6[%c1_240, %c3_241] : memref<2x4xf32, #tpu.memory_space<smem>>
    %c0_242 = arith.constant 0 : index
    %132 = memref.load %arg7[%c0_242] : memref<2xf32, #tpu.memory_space<smem>>
    %c1_243 = arith.constant 1 : index
    %133 = memref.load %arg7[%c1_243] : memref<2xf32, #tpu.memory_space<smem>>
    %c0_i32 = arith.constant 0 : i32
    %c16_i32 = arith.constant 16 : i32
    %134 = arith.muli %c0_i32, %c16_i32 : i32
    %135 = tpu.assume_multiple %134, 16 : i32
    %c0_244 = arith.constant 0 : index
    %136 = arith.index_cast %135 : i32 to index
    %c0_245 = arith.constant 0 : index
    %137 = vector.load %arg1[%c0_244, %136, %c0_245] : memref<10x16x128xbf16, #tpu.memory_space<vmem>>, vector<1x16x128xbf16>
    %138 = vector.shape_cast %137 : vector<1x16x128xbf16> to vector<16x128xbf16>
    %139 = arith.extf %138 : vector<16x128xbf16> to vector<16x128xf32>
    %c1_246 = arith.constant 1 : index
    %140 = arith.index_cast %135 : i32 to index
    %c0_247 = arith.constant 0 : index
    %141 = vector.load %arg1[%c1_246, %140, %c0_247] : memref<10x16x128xbf16, #tpu.memory_space<vmem>>, vector<1x16x128xbf16>
    %142 = vector.shape_cast %141 : vector<1x16x128xbf16> to vector<16x128xbf16>
    %143 = arith.extf %142 : vector<16x128xbf16> to vector<16x128xf32>
    %c2_248 = arith.constant 2 : index
    %144 = arith.index_cast %135 : i32 to index
    %c0_249 = arith.constant 0 : index
    %145 = vector.load %arg1[%c2_248, %144, %c0_249] : memref<10x16x128xbf16, #tpu.memory_space<vmem>>, vector<1x16x128xbf16>
    %146 = vector.shape_cast %145 : vector<1x16x128xbf16> to vector<16x128xbf16>
    %147 = arith.extf %146 : vector<16x128xbf16> to vector<16x128xf32>
    %c3_250 = arith.constant 3 : index
    %148 = arith.index_cast %135 : i32 to index
    %c0_251 = arith.constant 0 : index
    %149 = vector.load %arg1[%c3_250, %148, %c0_251] : memref<10x16x128xbf16, #tpu.memory_space<vmem>>, vector<1x16x128xbf16>
    %150 = vector.shape_cast %149 : vector<1x16x128xbf16> to vector<16x128xbf16>
    %151 = arith.extf %150 : vector<16x128xbf16> to vector<16x128xf32>
    %c4_252 = arith.constant 4 : index
    %152 = arith.index_cast %135 : i32 to index
    %c0_253 = arith.constant 0 : index
    %153 = vector.load %arg1[%c4_252, %152, %c0_253] : memref<10x16x128xbf16, #tpu.memory_space<vmem>>, vector<1x16x128xbf16>
    %154 = vector.shape_cast %153 : vector<1x16x128xbf16> to vector<16x128xbf16>
    %155 = arith.extf %154 : vector<16x128xbf16> to vector<16x128xf32>
    %c5_254 = arith.constant 5 : index
    %156 = arith.index_cast %135 : i32 to index
    %c0_255 = arith.constant 0 : index
    %157 = vector.load %arg1[%c5_254, %156, %c0_255] : memref<10x16x128xbf16, #tpu.memory_space<vmem>>, vector<1x16x128xbf16>
    %158 = vector.shape_cast %157 : vector<1x16x128xbf16> to vector<16x128xbf16>
    %159 = arith.extf %158 : vector<16x128xbf16> to vector<16x128xf32>
    %c6_256 = arith.constant 6 : index
    %160 = arith.index_cast %135 : i32 to index
    %c0_257 = arith.constant 0 : index
    %161 = vector.load %arg1[%c6_256, %160, %c0_257] : memref<10x16x128xbf16, #tpu.memory_space<vmem>>, vector<1x16x128xbf16>
    %162 = vector.shape_cast %161 : vector<1x16x128xbf16> to vector<16x128xbf16>
    %163 = arith.extf %162 : vector<16x128xbf16> to vector<16x128xf32>
    %c7_258 = arith.constant 7 : index
    %164 = arith.index_cast %135 : i32 to index
    %c0_259 = arith.constant 0 : index
    %165 = vector.load %arg1[%c7_258, %164, %c0_259] : memref<10x16x128xbf16, #tpu.memory_space<vmem>>, vector<1x16x128xbf16>
    %166 = vector.shape_cast %165 : vector<1x16x128xbf16> to vector<16x128xbf16>
    %167 = arith.extf %166 : vector<16x128xbf16> to vector<16x128xf32>
    %c8_260 = arith.constant 8 : index
    %168 = arith.index_cast %135 : i32 to index
    %c0_261 = arith.constant 0 : index
    %169 = vector.load %arg1[%c8_260, %168, %c0_261] : memref<10x16x128xbf16, #tpu.memory_space<vmem>>, vector<1x16x128xbf16>
    %170 = vector.shape_cast %169 : vector<1x16x128xbf16> to vector<16x128xbf16>
    %171 = arith.extf %170 : vector<16x128xbf16> to vector<16x128xf32>
    %c9_262 = arith.constant 9 : index
    %172 = arith.index_cast %135 : i32 to index
    %c0_263 = arith.constant 0 : index
    %173 = vector.load %arg1[%c9_262, %172, %c0_263] : memref<10x16x128xbf16, #tpu.memory_space<vmem>>, vector<1x16x128xbf16>
    %174 = vector.shape_cast %173 : vector<1x16x128xbf16> to vector<16x128xbf16>
    %175 = arith.extf %174 : vector<16x128xbf16> to vector<16x128xf32>
    %176 = vector.broadcast %0 : f32 to vector<16x128xf32>
    %177 = arith.mulf %176, %139 : vector<16x128xf32>
    %178 = vector.broadcast %1 : f32 to vector<16x128xf32>
    %179 = arith.mulf %178, %143 : vector<16x128xf32>
    %180 = arith.addf %177, %179 : vector<16x128xf32>
    %181 = vector.broadcast %2 : f32 to vector<16x128xf32>
    %182 = arith.mulf %181, %147 : vector<16x128xf32>
    %183 = arith.addf %180, %182 : vector<16x128xf32>
    %184 = vector.broadcast %3 : f32 to vector<16x128xf32>
    %185 = arith.mulf %184, %151 : vector<16x128xf32>
    %186 = arith.addf %183, %185 : vector<16x128xf32>
    %187 = vector.broadcast %4 : f32 to vector<16x128xf32>
    %188 = arith.mulf %187, %155 : vector<16x128xf32>
    %189 = arith.addf %186, %188 : vector<16x128xf32>
    %190 = vector.broadcast %5 : f32 to vector<16x128xf32>
    %191 = arith.mulf %190, %159 : vector<16x128xf32>
    %192 = arith.addf %189, %191 : vector<16x128xf32>
    %193 = vector.broadcast %6 : f32 to vector<16x128xf32>
    %194 = arith.mulf %193, %163 : vector<16x128xf32>
    %195 = arith.addf %192, %194 : vector<16x128xf32>
    %196 = vector.broadcast %7 : f32 to vector<16x128xf32>
    %197 = arith.mulf %196, %167 : vector<16x128xf32>
    %198 = arith.addf %195, %197 : vector<16x128xf32>
    %199 = vector.broadcast %8 : f32 to vector<16x128xf32>
    %200 = arith.mulf %199, %171 : vector<16x128xf32>
    %201 = arith.addf %198, %200 : vector<16x128xf32>
    %202 = vector.broadcast %9 : f32 to vector<16x128xf32>
    %203 = arith.mulf %202, %175 : vector<16x128xf32>
    %204 = arith.addf %201, %203 : vector<16x128xf32>
    %205 = vector.broadcast %80 : f32 to vector<16x128xf32>
    %206 = arith.addf %204, %205 : vector<16x128xf32>
    %cst = arith.constant 0.000000e+00 : f32
    %207 = vector.broadcast %cst : f32 to vector<16x128xf32>
    %208 = arith.maximumf %206, %207 : vector<16x128xf32>
    %209 = vector.broadcast %10 : f32 to vector<16x128xf32>
    %210 = arith.mulf %209, %139 : vector<16x128xf32>
    %211 = vector.broadcast %11 : f32 to vector<16x128xf32>
    %212 = arith.mulf %211, %143 : vector<16x128xf32>
    %213 = arith.addf %210, %212 : vector<16x128xf32>
    %214 = vector.broadcast %12 : f32 to vector<16x128xf32>
    %215 = arith.mulf %214, %147 : vector<16x128xf32>
    %216 = arith.addf %213, %215 : vector<16x128xf32>
    %217 = vector.broadcast %13 : f32 to vector<16x128xf32>
    %218 = arith.mulf %217, %151 : vector<16x128xf32>
    %219 = arith.addf %216, %218 : vector<16x128xf32>
    %220 = vector.broadcast %14 : f32 to vector<16x128xf32>
    %221 = arith.mulf %220, %155 : vector<16x128xf32>
    %222 = arith.addf %219, %221 : vector<16x128xf32>
    %223 = vector.broadcast %15 : f32 to vector<16x128xf32>
    %224 = arith.mulf %223, %159 : vector<16x128xf32>
    %225 = arith.addf %222, %224 : vector<16x128xf32>
    %226 = vector.broadcast %16 : f32 to vector<16x128xf32>
    %227 = arith.mulf %226, %163 : vector<16x128xf32>
    %228 = arith.addf %225, %227 : vector<16x128xf32>
    %229 = vector.broadcast %17 : f32 to vector<16x128xf32>
    %230 = arith.mulf %229, %167 : vector<16x128xf32>
    %231 = arith.addf %228, %230 : vector<16x128xf32>
    %232 = vector.broadcast %18 : f32 to vector<16x128xf32>
    %233 = arith.mulf %232, %171 : vector<16x128xf32>
    %234 = arith.addf %231, %233 : vector<16x128xf32>
    %235 = vector.broadcast %19 : f32 to vector<16x128xf32>
    %236 = arith.mulf %235, %175 : vector<16x128xf32>
    %237 = arith.addf %234, %236 : vector<16x128xf32>
    %238 = vector.broadcast %81 : f32 to vector<16x128xf32>
    %239 = arith.addf %237, %238 : vector<16x128xf32>
    %cst_264 = arith.constant 0.000000e+00 : f32
    %240 = vector.broadcast %cst_264 : f32 to vector<16x128xf32>
    %241 = arith.maximumf %239, %240 : vector<16x128xf32>
    %242 = vector.broadcast %20 : f32 to vector<16x128xf32>
    %243 = arith.mulf %242, %139 : vector<16x128xf32>
    %244 = vector.broadcast %21 : f32 to vector<16x128xf32>
    %245 = arith.mulf %244, %143 : vector<16x128xf32>
    %246 = arith.addf %243, %245 : vector<16x128xf32>
    %247 = vector.broadcast %22 : f32 to vector<16x128xf32>
    %248 = arith.mulf %247, %147 : vector<16x128xf32>
    %249 = arith.addf %246, %248 : vector<16x128xf32>
    %250 = vector.broadcast %23 : f32 to vector<16x128xf32>
    %251 = arith.mulf %250, %151 : vector<16x128xf32>
    %252 = arith.addf %249, %251 : vector<16x128xf32>
    %253 = vector.broadcast %24 : f32 to vector<16x128xf32>
    %254 = arith.mulf %253, %155 : vector<16x128xf32>
    %255 = arith.addf %252, %254 : vector<16x128xf32>
    %256 = vector.broadcast %25 : f32 to vector<16x128xf32>
    %257 = arith.mulf %256, %159 : vector<16x128xf32>
    %258 = arith.addf %255, %257 : vector<16x128xf32>
    %259 = vector.broadcast %26 : f32 to vector<16x128xf32>
    %260 = arith.mulf %259, %163 : vector<16x128xf32>
    %261 = arith.addf %258, %260 : vector<16x128xf32>
    %262 = vector.broadcast %27 : f32 to vector<16x128xf32>
    %263 = arith.mulf %262, %167 : vector<16x128xf32>
    %264 = arith.addf %261, %263 : vector<16x128xf32>
    %265 = vector.broadcast %28 : f32 to vector<16x128xf32>
    %266 = arith.mulf %265, %171 : vector<16x128xf32>
    %267 = arith.addf %264, %266 : vector<16x128xf32>
    %268 = vector.broadcast %29 : f32 to vector<16x128xf32>
    %269 = arith.mulf %268, %175 : vector<16x128xf32>
    %270 = arith.addf %267, %269 : vector<16x128xf32>
    %271 = vector.broadcast %82 : f32 to vector<16x128xf32>
    %272 = arith.addf %270, %271 : vector<16x128xf32>
    %cst_265 = arith.constant 0.000000e+00 : f32
    %273 = vector.broadcast %cst_265 : f32 to vector<16x128xf32>
    %274 = arith.maximumf %272, %273 : vector<16x128xf32>
    %275 = vector.broadcast %30 : f32 to vector<16x128xf32>
    %276 = arith.mulf %275, %139 : vector<16x128xf32>
    %277 = vector.broadcast %31 : f32 to vector<16x128xf32>
    %278 = arith.mulf %277, %143 : vector<16x128xf32>
    %279 = arith.addf %276, %278 : vector<16x128xf32>
    %280 = vector.broadcast %32 : f32 to vector<16x128xf32>
    %281 = arith.mulf %280, %147 : vector<16x128xf32>
    %282 = arith.addf %279, %281 : vector<16x128xf32>
    %283 = vector.broadcast %33 : f32 to vector<16x128xf32>
    %284 = arith.mulf %283, %151 : vector<16x128xf32>
    %285 = arith.addf %282, %284 : vector<16x128xf32>
    %286 = vector.broadcast %34 : f32 to vector<16x128xf32>
    %287 = arith.mulf %286, %155 : vector<16x128xf32>
    %288 = arith.addf %285, %287 : vector<16x128xf32>
    %289 = vector.broadcast %35 : f32 to vector<16x128xf32>
    %290 = arith.mulf %289, %159 : vector<16x128xf32>
    %291 = arith.addf %288, %290 : vector<16x128xf32>
    %292 = vector.broadcast %36 : f32 to vector<16x128xf32>
    %293 = arith.mulf %292, %163 : vector<16x128xf32>
    %294 = arith.addf %291, %293 : vector<16x128xf32>
    %295 = vector.broadcast %37 : f32 to vector<16x128xf32>
    %296 = arith.mulf %295, %167 : vector<16x128xf32>
    %297 = arith.addf %294, %296 : vector<16x128xf32>
    %298 = vector.broadcast %38 : f32 to vector<16x128xf32>
    %299 = arith.mulf %298, %171 : vector<16x128xf32>
    %300 = arith.addf %297, %299 : vector<16x128xf32>
    %301 = vector.broadcast %39 : f32 to vector<16x128xf32>
    %302 = arith.mulf %301, %175 : vector<16x128xf32>
    %303 = arith.addf %300, %302 : vector<16x128xf32>
    %304 = vector.broadcast %83 : f32 to vector<16x128xf32>
    %305 = arith.addf %303, %304 : vector<16x128xf32>
    %cst_266 = arith.constant 0.000000e+00 : f32
    %306 = vector.broadcast %cst_266 : f32 to vector<16x128xf32>
    %307 = arith.maximumf %305, %306 : vector<16x128xf32>
    %308 = vector.broadcast %40 : f32 to vector<16x128xf32>
    %309 = arith.mulf %308, %139 : vector<16x128xf32>
    %310 = vector.broadcast %41 : f32 to vector<16x128xf32>
    %311 = arith.mulf %310, %143 : vector<16x128xf32>
    %312 = arith.addf %309, %311 : vector<16x128xf32>
    %313 = vector.broadcast %42 : f32 to vector<16x128xf32>
    %314 = arith.mulf %313, %147 : vector<16x128xf32>
    %315 = arith.addf %312, %314 : vector<16x128xf32>
    %316 = vector.broadcast %43 : f32 to vector<16x128xf32>
    %317 = arith.mulf %316, %151 : vector<16x128xf32>
    %318 = arith.addf %315, %317 : vector<16x128xf32>
    %319 = vector.broadcast %44 : f32 to vector<16x128xf32>
    %320 = arith.mulf %319, %155 : vector<16x128xf32>
    %321 = arith.addf %318, %320 : vector<16x128xf32>
    %322 = vector.broadcast %45 : f32 to vector<16x128xf32>
    %323 = arith.mulf %322, %159 : vector<16x128xf32>
    %324 = arith.addf %321, %323 : vector<16x128xf32>
    %325 = vector.broadcast %46 : f32 to vector<16x128xf32>
    %326 = arith.mulf %325, %163 : vector<16x128xf32>
    %327 = arith.addf %324, %326 : vector<16x128xf32>
    %328 = vector.broadcast %47 : f32 to vector<16x128xf32>
    %329 = arith.mulf %328, %167 : vector<16x128xf32>
    %330 = arith.addf %327, %329 : vector<16x128xf32>
    %331 = vector.broadcast %48 : f32 to vector<16x128xf32>
    %332 = arith.mulf %331, %171 : vector<16x128xf32>
    %333 = arith.addf %330, %332 : vector<16x128xf32>
    %334 = vector.broadcast %49 : f32 to vector<16x128xf32>
    %335 = arith.mulf %334, %175 : vector<16x128xf32>
    %336 = arith.addf %333, %335 : vector<16x128xf32>
    %337 = vector.broadcast %84 : f32 to vector<16x128xf32>
    %338 = arith.addf %336, %337 : vector<16x128xf32>
    %cst_267 = arith.constant 0.000000e+00 : f32
    %339 = vector.broadcast %cst_267 : f32 to vector<16x128xf32>
    %340 = arith.maximumf %338, %339 : vector<16x128xf32>
    %341 = vector.broadcast %50 : f32 to vector<16x128xf32>
    %342 = arith.mulf %341, %139 : vector<16x128xf32>
    %343 = vector.broadcast %51 : f32 to vector<16x128xf32>
    %344 = arith.mulf %343, %143 : vector<16x128xf32>
    %345 = arith.addf %342, %344 : vector<16x128xf32>
    %346 = vector.broadcast %52 : f32 to vector<16x128xf32>
    %347 = arith.mulf %346, %147 : vector<16x128xf32>
    %348 = arith.addf %345, %347 : vector<16x128xf32>
    %349 = vector.broadcast %53 : f32 to vector<16x128xf32>
    %350 = arith.mulf %349, %151 : vector<16x128xf32>
    %351 = arith.addf %348, %350 : vector<16x128xf32>
    %352 = vector.broadcast %54 : f32 to vector<16x128xf32>
    %353 = arith.mulf %352, %155 : vector<16x128xf32>
    %354 = arith.addf %351, %353 : vector<16x128xf32>
    %355 = vector.broadcast %55 : f32 to vector<16x128xf32>
    %356 = arith.mulf %355, %159 : vector<16x128xf32>
    %357 = arith.addf %354, %356 : vector<16x128xf32>
    %358 = vector.broadcast %56 : f32 to vector<16x128xf32>
    %359 = arith.mulf %358, %163 : vector<16x128xf32>
    %360 = arith.addf %357, %359 : vector<16x128xf32>
    %361 = vector.broadcast %57 : f32 to vector<16x128xf32>
    %362 = arith.mulf %361, %167 : vector<16x128xf32>
    %363 = arith.addf %360, %362 : vector<16x128xf32>
    %364 = vector.broadcast %58 : f32 to vector<16x128xf32>
    %365 = arith.mulf %364, %171 : vector<16x128xf32>
    %366 = arith.addf %363, %365 : vector<16x128xf32>
    %367 = vector.broadcast %59 : f32 to vector<16x128xf32>
    %368 = arith.mulf %367, %175 : vector<16x128xf32>
    %369 = arith.addf %366, %368 : vector<16x128xf32>
    %370 = vector.broadcast %85 : f32 to vector<16x128xf32>
    %371 = arith.addf %369, %370 : vector<16x128xf32>
    %cst_268 = arith.constant 0.000000e+00 : f32
    %372 = vector.broadcast %cst_268 : f32 to vector<16x128xf32>
    %373 = arith.maximumf %371, %372 : vector<16x128xf32>
    %374 = vector.broadcast %60 : f32 to vector<16x128xf32>
    %375 = arith.mulf %374, %139 : vector<16x128xf32>
    %376 = vector.broadcast %61 : f32 to vector<16x128xf32>
    %377 = arith.mulf %376, %143 : vector<16x128xf32>
    %378 = arith.addf %375, %377 : vector<16x128xf32>
    %379 = vector.broadcast %62 : f32 to vector<16x128xf32>
    %380 = arith.mulf %379, %147 : vector<16x128xf32>
    %381 = arith.addf %378, %380 : vector<16x128xf32>
    %382 = vector.broadcast %63 : f32 to vector<16x128xf32>
    %383 = arith.mulf %382, %151 : vector<16x128xf32>
    %384 = arith.addf %381, %383 : vector<16x128xf32>
    %385 = vector.broadcast %64 : f32 to vector<16x128xf32>
    %386 = arith.mulf %385, %155 : vector<16x128xf32>
    %387 = arith.addf %384, %386 : vector<16x128xf32>
    %388 = vector.broadcast %65 : f32 to vector<16x128xf32>
    %389 = arith.mulf %388, %159 : vector<16x128xf32>
    %390 = arith.addf %387, %389 : vector<16x128xf32>
    %391 = vector.broadcast %66 : f32 to vector<16x128xf32>
    %392 = arith.mulf %391, %163 : vector<16x128xf32>
    %393 = arith.addf %390, %392 : vector<16x128xf32>
    %394 = vector.broadcast %67 : f32 to vector<16x128xf32>
    %395 = arith.mulf %394, %167 : vector<16x128xf32>
    %396 = arith.addf %393, %395 : vector<16x128xf32>
    %397 = vector.broadcast %68 : f32 to vector<16x128xf32>
    %398 = arith.mulf %397, %171 : vector<16x128xf32>
    %399 = arith.addf %396, %398 : vector<16x128xf32>
    %400 = vector.broadcast %69 : f32 to vector<16x128xf32>
    %401 = arith.mulf %400, %175 : vector<16x128xf32>
    %402 = arith.addf %399, %401 : vector<16x128xf32>
    %403 = vector.broadcast %86 : f32 to vector<16x128xf32>
    %404 = arith.addf %402, %403 : vector<16x128xf32>
    %cst_269 = arith.constant 0.000000e+00 : f32
    %405 = vector.broadcast %cst_269 : f32 to vector<16x128xf32>
    %406 = arith.maximumf %404, %405 : vector<16x128xf32>
    %407 = vector.broadcast %70 : f32 to vector<16x128xf32>
    %408 = arith.mulf %407, %139 : vector<16x128xf32>
    %409 = vector.broadcast %71 : f32 to vector<16x128xf32>
    %410 = arith.mulf %409, %143 : vector<16x128xf32>
    %411 = arith.addf %408, %410 : vector<16x128xf32>
    %412 = vector.broadcast %72 : f32 to vector<16x128xf32>
    %413 = arith.mulf %412, %147 : vector<16x128xf32>
    %414 = arith.addf %411, %413 : vector<16x128xf32>
    %415 = vector.broadcast %73 : f32 to vector<16x128xf32>
    %416 = arith.mulf %415, %151 : vector<16x128xf32>
    %417 = arith.addf %414, %416 : vector<16x128xf32>
    %418 = vector.broadcast %74 : f32 to vector<16x128xf32>
    %419 = arith.mulf %418, %155 : vector<16x128xf32>
    %420 = arith.addf %417, %419 : vector<16x128xf32>
    %421 = vector.broadcast %75 : f32 to vector<16x128xf32>
    %422 = arith.mulf %421, %159 : vector<16x128xf32>
    %423 = arith.addf %420, %422 : vector<16x128xf32>
    %424 = vector.broadcast %76 : f32 to vector<16x128xf32>
    %425 = arith.mulf %424, %163 : vector<16x128xf32>
    %426 = arith.addf %423, %425 : vector<16x128xf32>
    %427 = vector.broadcast %77 : f32 to vector<16x128xf32>
    %428 = arith.mulf %427, %167 : vector<16x128xf32>
    %429 = arith.addf %426, %428 : vector<16x128xf32>
    %430 = vector.broadcast %78 : f32 to vector<16x128xf32>
    %431 = arith.mulf %430, %171 : vector<16x128xf32>
    %432 = arith.addf %429, %431 : vector<16x128xf32>
    %433 = vector.broadcast %79 : f32 to vector<16x128xf32>
    %434 = arith.mulf %433, %175 : vector<16x128xf32>
    %435 = arith.addf %432, %434 : vector<16x128xf32>
    %436 = vector.broadcast %87 : f32 to vector<16x128xf32>
    %437 = arith.addf %435, %436 : vector<16x128xf32>
    %cst_270 = arith.constant 0.000000e+00 : f32
    %438 = vector.broadcast %cst_270 : f32 to vector<16x128xf32>
    %439 = arith.maximumf %437, %438 : vector<16x128xf32>
    %440 = vector.broadcast %88 : f32 to vector<16x128xf32>
    %441 = arith.mulf %440, %208 : vector<16x128xf32>
    %442 = vector.broadcast %89 : f32 to vector<16x128xf32>
    %443 = arith.mulf %442, %241 : vector<16x128xf32>
    %444 = arith.addf %441, %443 : vector<16x128xf32>
    %445 = vector.broadcast %90 : f32 to vector<16x128xf32>
    %446 = arith.mulf %445, %274 : vector<16x128xf32>
    %447 = arith.addf %444, %446 : vector<16x128xf32>
    %448 = vector.broadcast %91 : f32 to vector<16x128xf32>
    %449 = arith.mulf %448, %307 : vector<16x128xf32>
    %450 = arith.addf %447, %449 : vector<16x128xf32>
    %451 = vector.broadcast %92 : f32 to vector<16x128xf32>
    %452 = arith.mulf %451, %340 : vector<16x128xf32>
    %453 = arith.addf %450, %452 : vector<16x128xf32>
    %454 = vector.broadcast %93 : f32 to vector<16x128xf32>
    %455 = arith.mulf %454, %373 : vector<16x128xf32>
    %456 = arith.addf %453, %455 : vector<16x128xf32>
    %457 = vector.broadcast %94 : f32 to vector<16x128xf32>
    %458 = arith.mulf %457, %406 : vector<16x128xf32>
    %459 = arith.addf %456, %458 : vector<16x128xf32>
    %460 = vector.broadcast %95 : f32 to vector<16x128xf32>
    %461 = arith.mulf %460, %439 : vector<16x128xf32>
    %462 = arith.addf %459, %461 : vector<16x128xf32>
    %463 = vector.broadcast %120 : f32 to vector<16x128xf32>
    %464 = arith.addf %462, %463 : vector<16x128xf32>
    %cst_271 = arith.constant 0.000000e+00 : f32
    %465 = vector.broadcast %cst_271 : f32 to vector<16x128xf32>
    %466 = arith.maximumf %464, %465 : vector<16x128xf32>
    %467 = vector.broadcast %96 : f32 to vector<16x128xf32>
    %468 = arith.mulf %467, %208 : vector<16x128xf32>
    %469 = vector.broadcast %97 : f32 to vector<16x128xf32>
    %470 = arith.mulf %469, %241 : vector<16x128xf32>
    %471 = arith.addf %468, %470 : vector<16x128xf32>
    %472 = vector.broadcast %98 : f32 to vector<16x128xf32>
    %473 = arith.mulf %472, %274 : vector<16x128xf32>
    %474 = arith.addf %471, %473 : vector<16x128xf32>
    %475 = vector.broadcast %99 : f32 to vector<16x128xf32>
    %476 = arith.mulf %475, %307 : vector<16x128xf32>
    %477 = arith.addf %474, %476 : vector<16x128xf32>
    %478 = vector.broadcast %100 : f32 to vector<16x128xf32>
    %479 = arith.mulf %478, %340 : vector<16x128xf32>
    %480 = arith.addf %477, %479 : vector<16x128xf32>
    %481 = vector.broadcast %101 : f32 to vector<16x128xf32>
    %482 = arith.mulf %481, %373 : vector<16x128xf32>
    %483 = arith.addf %480, %482 : vector<16x128xf32>
    %484 = vector.broadcast %102 : f32 to vector<16x128xf32>
    %485 = arith.mulf %484, %406 : vector<16x128xf32>
    %486 = arith.addf %483, %485 : vector<16x128xf32>
    %487 = vector.broadcast %103 : f32 to vector<16x128xf32>
    %488 = arith.mulf %487, %439 : vector<16x128xf32>
    %489 = arith.addf %486, %488 : vector<16x128xf32>
    %490 = vector.broadcast %121 : f32 to vector<16x128xf32>
    %491 = arith.addf %489, %490 : vector<16x128xf32>
    %cst_272 = arith.constant 0.000000e+00 : f32
    %492 = vector.broadcast %cst_272 : f32 to vector<16x128xf32>
    %493 = arith.maximumf %491, %492 : vector<16x128xf32>
    %494 = vector.broadcast %104 : f32 to vector<16x128xf32>
    %495 = arith.mulf %494, %208 : vector<16x128xf32>
    %496 = vector.broadcast %105 : f32 to vector<16x128xf32>
    %497 = arith.mulf %496, %241 : vector<16x128xf32>
    %498 = arith.addf %495, %497 : vector<16x128xf32>
    %499 = vector.broadcast %106 : f32 to vector<16x128xf32>
    %500 = arith.mulf %499, %274 : vector<16x128xf32>
    %501 = arith.addf %498, %500 : vector<16x128xf32>
    %502 = vector.broadcast %107 : f32 to vector<16x128xf32>
    %503 = arith.mulf %502, %307 : vector<16x128xf32>
    %504 = arith.addf %501, %503 : vector<16x128xf32>
    %505 = vector.broadcast %108 : f32 to vector<16x128xf32>
    %506 = arith.mulf %505, %340 : vector<16x128xf32>
    %507 = arith.addf %504, %506 : vector<16x128xf32>
    %508 = vector.broadcast %109 : f32 to vector<16x128xf32>
    %509 = arith.mulf %508, %373 : vector<16x128xf32>
    %510 = arith.addf %507, %509 : vector<16x128xf32>
    %511 = vector.broadcast %110 : f32 to vector<16x128xf32>
    %512 = arith.mulf %511, %406 : vector<16x128xf32>
    %513 = arith.addf %510, %512 : vector<16x128xf32>
    %514 = vector.broadcast %111 : f32 to vector<16x128xf32>
    %515 = arith.mulf %514, %439 : vector<16x128xf32>
    %516 = arith.addf %513, %515 : vector<16x128xf32>
    %517 = vector.broadcast %122 : f32 to vector<16x128xf32>
    %518 = arith.addf %516, %517 : vector<16x128xf32>
    %cst_273 = arith.constant 0.000000e+00 : f32
    %519 = vector.broadcast %cst_273 : f32 to vector<16x128xf32>
    %520 = arith.maximumf %518, %519 : vector<16x128xf32>
    %521 = vector.broadcast %112 : f32 to vector<16x128xf32>
    %522 = arith.mulf %521, %208 : vector<16x128xf32>
    %523 = vector.broadcast %113 : f32 to vector<16x128xf32>
    %524 = arith.mulf %523, %241 : vector<16x128xf32>
    %525 = arith.addf %522, %524 : vector<16x128xf32>
    %526 = vector.broadcast %114 : f32 to vector<16x128xf32>
    %527 = arith.mulf %526, %274 : vector<16x128xf32>
    %528 = arith.addf %525, %527 : vector<16x128xf32>
    %529 = vector.broadcast %115 : f32 to vector<16x128xf32>
    %530 = arith.mulf %529, %307 : vector<16x128xf32>
    %531 = arith.addf %528, %530 : vector<16x128xf32>
    %532 = vector.broadcast %116 : f32 to vector<16x128xf32>
    %533 = arith.mulf %532, %340 : vector<16x128xf32>
    %534 = arith.addf %531, %533 : vector<16x128xf32>
    %535 = vector.broadcast %117 : f32 to vector<16x128xf32>
    %536 = arith.mulf %535, %373 : vector<16x128xf32>
    %537 = arith.addf %534, %536 : vector<16x128xf32>
    %538 = vector.broadcast %118 : f32 to vector<16x128xf32>
    %539 = arith.mulf %538, %406 : vector<16x128xf32>
    %540 = arith.addf %537, %539 : vector<16x128xf32>
    %541 = vector.broadcast %119 : f32 to vector<16x128xf32>
    %542 = arith.mulf %541, %439 : vector<16x128xf32>
    %543 = arith.addf %540, %542 : vector<16x128xf32>
    %544 = vector.broadcast %123 : f32 to vector<16x128xf32>
    %545 = arith.addf %543, %544 : vector<16x128xf32>
    %cst_274 = arith.constant 0.000000e+00 : f32
    %546 = vector.broadcast %cst_274 : f32 to vector<16x128xf32>
    %547 = arith.maximumf %545, %546 : vector<16x128xf32>
    %548 = vector.broadcast %124 : f32 to vector<16x128xf32>
    %549 = arith.mulf %548, %466 : vector<16x128xf32>
    %550 = vector.broadcast %125 : f32 to vector<16x128xf32>
    %551 = arith.mulf %550, %493 : vector<16x128xf32>
    %552 = arith.addf %549, %551 : vector<16x128xf32>
    %553 = vector.broadcast %126 : f32 to vector<16x128xf32>
    %554 = arith.mulf %553, %520 : vector<16x128xf32>
    %555 = arith.addf %552, %554 : vector<16x128xf32>
    %556 = vector.broadcast %127 : f32 to vector<16x128xf32>
    %557 = arith.mulf %556, %547 : vector<16x128xf32>
    %558 = arith.addf %555, %557 : vector<16x128xf32>
    %559 = vector.broadcast %132 : f32 to vector<16x128xf32>
    %560 = arith.addf %558, %559 : vector<16x128xf32>
    %c0_275 = arith.constant 0 : index
    %561 = arith.index_cast %135 : i32 to index
    %c0_276 = arith.constant 0 : index
    %562 = vector.load %arg8[%c0_275, %561, %c0_276] : memref<2x16x128xf32, #tpu.memory_space<vmem>>, vector<1x16x128xf32>
    %563 = vector.shape_cast %562 : vector<1x16x128xf32> to vector<16x128xf32>
    %564 = vector.shape_cast %560 : vector<16x128xf32> to vector<1x16x128xf32>
    tpu.vector_store %arg8[%c0_275, %561, %c0_276], %564 {strides = array<i32>} : memref<2x16x128xf32, #tpu.memory_space<vmem>>, vector<1x16x128xf32>,
    %565 = vector.broadcast %128 : f32 to vector<16x128xf32>
    %566 = arith.mulf %565, %466 : vector<16x128xf32>
    %567 = vector.broadcast %129 : f32 to vector<16x128xf32>
    %568 = arith.mulf %567, %493 : vector<16x128xf32>
    %569 = arith.addf %566, %568 : vector<16x128xf32>
    %570 = vector.broadcast %130 : f32 to vector<16x128xf32>
    %571 = arith.mulf %570, %520 : vector<16x128xf32>
    %572 = arith.addf %569, %571 : vector<16x128xf32>
    %573 = vector.broadcast %131 : f32 to vector<16x128xf32>
    %574 = arith.mulf %573, %547 : vector<16x128xf32>
    %575 = arith.addf %572, %574 : vector<16x128xf32>
    %576 = vector.broadcast %133 : f32 to vector<16x128xf32>
    %577 = arith.addf %575, %576 : vector<16x128xf32>
    %c1_277 = arith.constant 1 : index
    %578 = arith.index_cast %135 : i32 to index
    %c0_278 = arith.constant 0 : index
    %579 = vector.load %arg8[%c1_277, %578, %c0_278] : memref<2x16x128xf32, #tpu.memory_space<vmem>>, vector<1x16x128xf32>
    %580 = vector.shape_cast %579 : vector<1x16x128xf32> to vector<16x128xf32>
    %581 = vector.shape_cast %577 : vector<16x128xf32> to vector<1x16x128xf32>
    tpu.vector_store %arg8[%c1_277, %578, %c0_278], %581 {strides = array<i32>} : memref<2x16x128xf32, #tpu.memory_space<vmem>>, vector<1x16x128xf32>,
    %c1_i32 = arith.constant 1 : i32
    return
  }
  func.func @transform_0(%arg0: i32) -> (i32, i32, i32) {
    %c0_i32 = arith.constant 0 : i32
    %c0_i32_0 = arith.constant 0 : i32
    %c0_i32_1 = arith.constant 0 : i32
    return %c0_i32, %arg0, %c0_i32_0 : i32, i32, i32
  }
  func.func @transform_1(%arg0: i32) -> (i32, i32) {
    %c0_i32 = arith.constant 0 : i32
    %c0_i32_0 = arith.constant 0 : i32
    %c0_i32_1 = arith.constant 0 : i32
    return %c0_i32, %c0_i32_0 : i32, i32
  }
  func.func @transform_2(%arg0: i32) -> i32 {
    %c0_i32 = arith.constant 0 : i32
    %c0_i32_0 = arith.constant 0 : i32
    return %c0_i32 : i32
  }
  func.func @transform_3(%arg0: i32) -> (i32, i32) {
    %c0_i32 = arith.constant 0 : i32
    %c0_i32_0 = arith.constant 0 : i32
    %c0_i32_1 = arith.constant 0 : i32
    return %c0_i32, %c0_i32_0 : i32, i32
  }
  func.func @transform_4(%arg0: i32) -> i32 {
    %c0_i32 = arith.constant 0 : i32
    %c0_i32_0 = arith.constant 0 : i32
    return %c0_i32 : i32
  }
  func.func @transform_5(%arg0: i32) -> (i32, i32) {
    %c0_i32 = arith.constant 0 : i32
    %c0_i32_0 = arith.constant 0 : i32
    %c0_i32_1 = arith.constant 0 : i32
    return %c0_i32, %c0_i32_0 : i32, i32
  }
  func.func @transform_6(%arg0: i32) -> i32 {
    %c0_i32 = arith.constant 0 : i32
    %c0_i32_0 = arith.constant 0 : i32
    return %c0_i32 : i32
  }
  func.func @transform_7(%arg0: i32) -> (i32, i32, i32) {
    %c0_i32 = arith.constant 0 : i32
    %c0_i32_0 = arith.constant 0 : i32
    %c0_i32_1 = arith.constant 0 : i32
    return %c0_i32, %arg0, %c0_i32_0 : i32, i32, i32
  }
}

</mosaic_0001>

<llo_original>
// kernel: tpu_custom_call.1
$region0: #{tpu_custom_call.1}
  #allocation0 [shape = 'u32[]', space=smem, size = 0x4, offset = 0x4, fixed_abs, tag = 'smem constant byte address 0x4 - core index']
  #allocation1 [shape = 'u32[72,128]{1,0:T(1,128)}', space=vmem, size = 0x9000, scoped, tag = 'internal scratch']
  %s0 = inlined_call_operand.hbm [shape: bf16[10,16,128], index: 0, kind: input, shape index: {}]
  %s1 = inlined_call_operand.hbm [shape: f32[8,10], index: 1, kind: input, shape index: {}]
  %s2 = inlined_call_operand.vmem [shape: f32[8], index: 2, kind: input, shape index: {}]
  %s3 = inlined_call_operand.hbm [shape: f32[4,8], index: 3, kind: input, shape index: {}]
  %s4 = inlined_call_operand.hbm [shape: f32[4], index: 4, kind: input, shape index: {}]
  %s5 = inlined_call_operand.vmem [shape: f32[2,4], index: 5, kind: input, shape index: {}]
  %s6 = inlined_call_operand.vmem [shape: f32[2], index: 6, kind: input, shape index: {}]
  %s7 = inlined_call_operand.hbm [shape: f32[2,16,128], index: 7, kind: output, shape index: {}]
  %s8 = sld [smem:[#allocation0]]
  $region66: #{tpu_custom_call.1} parent=0
    _
  %s10 = ssub.s32 1, %s8
  %s11 = scalar_select 0, %s10, %s8
  $region1: #{tpu_custom_call.1} parent=0
    #allocation2 [shape = 'u8[40960]{0}', space=vmem, size = 0xa000, scoped, tag = 'input window, operand 0, single buffered']
    #allocation3 [shape = 's32[1]{0}', space=sflag, size = 0x4, scoped, tag = 'scoped memory for tpu_custom_call.1']
    #allocation4 [shape = 's32[1]{0}', space=sflag, size = 0x4, scoped, tag = 'scoped memory for tpu_custom_call.1']
    #allocation5 [shape = 's32[1]{0}', space=sflag, size = 0x4, scoped, tag = 'scoped memory for tpu_custom_call.1']
    #allocation6 [shape = 's32[1]{0}', space=sflag, size = 0x4, scoped, tag = 'scoped memory for tpu_custom_call.1']
    #allocation7 [shape = 'u8[4096]{0}', space=smem, size = 0x1000, scoped, tag = 'input window, operand 1, single buffered']
    #allocation8 [shape = 'u8[512]{0}', space=smem, size = 0x200, scoped, tag = 'input window, operand 2, single buffered']
    #allocation9 [shape = 'u8[2048]{0}', space=smem, size = 0x800, scoped, tag = 'input window, operand 3, single buffered']
    #allocation10 [shape = 's32[1]{0}', space=sflag, size = 0x4, scoped, tag = 'scoped memory for tpu_custom_call.1']
    #allocation11 [shape = 'u8[512]{0}', space=smem, size = 0x200, scoped, tag = 'input window, operand 4, single buffered']
    #allocation12 [shape = 'u8[1024]{0}', space=smem, size = 0x400, scoped, tag = 'input window, operand 5, single buffered']
    #allocation13 [shape = 's32[1]{0}', space=sflag, size = 0x4, scoped, tag = 'scoped memory for tpu_custom_call.1']
    #allocation14 [shape = 'u8[512]{0}', space=smem, size = 0x200, scoped, tag = 'input window, operand 6, single buffered']
    #allocation15 [shape = 'u8[16384]{0}', space=vmem, size = 0x4000, scoped, tag = 'output window, operand 0, single buffered']
    %12 = vsyncpa [#allocation3], 0
    %13 = vsyncpa [#allocation5], 0
    %14 = vsyncpa [#allocation6], 0
    %15 = vsyncpa [#allocation10], 0
    %16 = vsyncpa [#allocation13], 0
    %17 = vsyncpa [#allocation4], 0
    // Predicated region
    $region2: #{tpu_custom_call.1} parent=1 // pred_check
      _
    $region3: #{tpu_custom_call.1} parent=1 // pred_check_branch
      %19 = sbr.rel (0) target = $region5
    $region4: #{tpu_custom_call.1} parent=1 // pred_region
      %21 = vsyncadd [#allocation3], 0
      %s22 = sshll.u32 %s0, 4
      %s23 = int_to_ptr.hbm [resolvable:$true] %s22
      %s24 = sshll.u32 [#allocation2], 4
      %s25 = int_to_ptr.vmem [resolvable:$true] %s24
      %30 = dma.hbm_to_vmem [thread:$0]  %s23, 1280, %s25, [#allocation3], 64, 64, 4
    $region5: #{tpu_custom_call.1} parent=1 // pred_fallthru
      _
    // Predicated region
    $region6: #{tpu_custom_call.1} parent=1 // pred_check
      _
    $region7: #{tpu_custom_call.1} parent=1 // pred_check_branch
      %32 = sbr.rel (0) target = $region9
    $region8: #{tpu_custom_call.1} parent=1 // pred_region
      %34 = vsyncadd [#allocation5], 0
      %s36 = sshll.u32 %s1, 4
      %s37 = int_to_ptr.hbm [resolvable:$true] %s36
      %39 = dma.hbm_to_smem %s37, 128, [#allocation7], [#allocation5]
    $region9: #{tpu_custom_call.1} parent=1 // pred_fallthru
      _
    // Predicated region
    $region10: #{tpu_custom_call.1} parent=1 // pred_check
      _
    $region11: #{tpu_custom_call.1} parent=1 // pred_check_branch
      %41 = sbr.rel (0) target = $region13
    $region12: #{tpu_custom_call.1} parent=1 // pred_region
      %43 = vsyncadd [#allocation6], 0
      %s45 = sshll.u32 %s2, 4
      %s46 = int_to_ptr.vmem [resolvable:$true] %s45
      %48 = dma.vmem_to_smem %s46, 16, [#allocation8], [#allocation6]
    $region13: #{tpu_custom_call.1} parent=1 // pred_fallthru
      _
    // Predicated region
    $region14: #{tpu_custom_call.1} parent=1 // pred_check
      _
    $region15: #{tpu_custom_call.1} parent=1 // pred_check_branch
      %50 = sbr.rel (0) target = $region17
    $region16: #{tpu_custom_call.1} parent=1 // pred_region
      %52 = vsyncadd [#allocation10], 0
      %s54 = sshll.u32 %s3, 4
      %s55 = int_to_ptr.hbm [resolvable:$true] %s54
      %57 = dma.hbm_to_smem %s55, 64, [#allocation9], [#allocation10]
    $region17: #{tpu_custom_call.1} parent=1 // pred_fallthru
      _
    // Predicated region
    $region18: #{tpu_custom_call.1} parent=1 // pred_check
      _
    $region19: #{tpu_custom_call.1} parent=1 // pred_check_branch
      %59 = sbr.rel (0) target = $region21
    $region20: #{tpu_custom_call.1} parent=1 // pred_region
      %61 = vsyncadd [#allocation10], 0
      %s63 = sshll.u32 %s4, 4
      %s64 = int_to_ptr.hbm [resolvable:$true] %s63
      %66 = dma.hbm_to_smem %s64, 16, [#allocation11], [#allocation10]
    $region21: #{tpu_custom_call.1} parent=1 // pred_fallthru
      _
    // Predicated region
    $region22: #{tpu_custom_call.1} parent=1 // pred_check
      _
    $region23: #{tpu_custom_call.1} parent=1 // pred_check_branch
      %68 = sbr.rel (0) target = $region25
    $region24: #{tpu_custom_call.1} parent=1 // pred_region
      %70 = vsyncadd [#allocation13], 0
      %s72 = sshll.u32 %s5, 4
      %s73 = int_to_ptr.vmem [resolvable:$true] %s72
      %75 = dma.vmem_to_smem %s73, 32, [#allocation12], [#allocation13]
    $region25: #{tpu_custom_call.1} parent=1 // pred_fallthru
      _
    // Predicated region
    $region26: #{tpu_custom_call.1} parent=1 // pred_check
      _
    $region27: #{tpu_custom_call.1} parent=1 // pred_check_branch
      %77 = sbr.rel (0) target = $region29
    $region28: #{tpu_custom_call.1} parent=1 // pred_region
      %79 = vsyncadd [#allocation13], 0
      %s81 = sshll.u32 %s6, 4
      %s82 = int_to_ptr.vmem [resolvable:$true] %s81
      %84 = dma.vmem_to_smem %s82, 16, [#allocation14], [#allocation13]
    $region29: #{tpu_custom_call.1} parent=1 // pred_fallthru
      _
    // Predicated region
    $region30: #{tpu_custom_call.1} parent=1 // pred_check
      _
    $region31: #{tpu_custom_call.1} parent=1 // pred_check_branch
      %86 = sbr.rel (0) target = $region33
    $region32: #{tpu_custom_call.1} parent=1 // pred_region
      %88 = dma.done [#allocation3], 1280
    $region33: #{tpu_custom_call.1} parent=1 // pred_fallthru
      _
    // Predicated region
    $region34: #{tpu_custom_call.1} parent=1 // pred_check
      _
    $region35: #{tpu_custom_call.1} parent=1 // pred_check_branch
      %90 = sbr.rel (0) target = $region37
    $region36: #{tpu_custom_call.1} parent=1 // pred_region
      %92 = dma.done [#allocation5], 128
    $region37: #{tpu_custom_call.1} parent=1 // pred_fallthru
      _
    // Predicated region
    $region38: #{tpu_custom_call.1} parent=1 // pred_check
      _
    $region39: #{tpu_custom_call.1} parent=1 // pred_check_branch
      %94 = sbr.rel (0) target = $region41
    $region40: #{tpu_custom_call.1} parent=1 // pred_region
      %96 = dma.done [#allocation6], 16
    $region41: #{tpu_custom_call.1} parent=1 // pred_fallthru
      _
    // Predicated region
    $region42: #{tpu_custom_call.1} parent=1 // pred_check
      _
    $region43: #{tpu_custom_call.1} parent=1 // pred_check_branch
      %98 = sbr.rel (0) target = $region45
    $region44: #{tpu_custom_call.1} parent=1 // pred_region
      %100 = dma.done [#allocation10], 64
    $region45: #{tpu_custom_call.1} parent=1 // pred_fallthru
      _
    // Predicated region
    $region46: #{tpu_custom_call.1} parent=1 // pred_check
      _
    $region47: #{tpu_custom_call.1} parent=1 // pred_check_branch
      %102 = sbr.rel (0) target = $region49
    $region48: #{tpu_custom_call.1} parent=1 // pred_region
      %104 = dma.done [#allocation10], 16
    $region49: #{tpu_custom_call.1} parent=1 // pred_fallthru
      _
    // Predicated region
    $region50: #{tpu_custom_call.1} parent=1 // pred_check
      _
    $region51: #{tpu_custom_call.1} parent=1 // pred_check_branch
      %106 = sbr.rel (0) target = $region53
    $region52: #{tpu_custom_call.1} parent=1 // pred_region
      %108 = dma.done [#allocation13], 32
    $region53: #{tpu_custom_call.1} parent=1 // pred_fallthru
      _
    // Predicated region
    $region54: #{tpu_custom_call.1} parent=1 // pred_check
      _
    $region55: #{tpu_custom_call.1} parent=1 // pred_check_branch
      %110 = sbr.rel (0) target = $region57
    $region56: #{tpu_custom_call.1} parent=1 // pred_region
      %112 = dma.done [#allocation13], 16
    $region57: #{tpu_custom_call.1} parent=1 // pred_fallthru
      _
    %113 = sfence
    %s114 = sld [smem:[#allocation7]]
    %s115 = sld [smem:[#allocation7 + $0x1]]
    %s116 = sld [smem:[#allocation7 + $0x2]]
    %s117 = sld [smem:[#allocation7 + $0x3]]
    %s118 = sld [smem:[#allocation7 + $0x4]]
    %s119 = sld [smem:[#allocation7 + $0x5]]
    %s120 = sld [smem:[#allocation7 + $0x6]]
    %s121 = sld [smem:[#allocation7 + $0x7]]
    %s122 = sld [smem:[#allocation7 + $0x8]]
    %s123 = sld [smem:[#allocation7 + $0x9]]
    %s124 = sld [smem:[#allocation7 + $0x80]]
    %s125 = sld [smem:[#allocation7 + $0x81]]
    %s126 = sld [smem:[#allocation7 + $0x82]]
    %s127 = sld [smem:[#allocation7 + $0x83]]
    %s128 = sld [smem:[#allocation7 + $0x84]]
    %s129 = sld [smem:[#allocation7 + $0x85]]
    %s130 = sld [smem:[#allocation7 + $0x86]]
    %s131 = sld [smem:[#allocation7 + $0x87]]
    %s132 = sld [smem:[#allocation7 + $0x88]]
    %s133 = sld [smem:[#allocation7 + $0x89]]
    %s134 = sld [smem:[#allocation7 + $0x100]]
    %s135 = sld [smem:[#allocation7 + $0x101]]
    %s136 = sld [smem:[#allocation7 + $0x102]]
    %s137 = sld [smem:[#allocation7 + $0x103]]
    %s138 = sld [smem:[#allocation7 + $0x104]]
    %s139 = sld [smem:[#allocation7 + $0x105]]
    %s140 = sld [smem:[#allocation7 + $0x106]]
    %s141 = sld [smem:[#allocation7 + $0x107]]
    %s142 = sld [smem:[#allocation7 + $0x108]]
    %s143 = sld [smem:[#allocation7 + $0x109]]
    %s144 = sld [smem:[#allocation7 + $0x180]]
    %s145 = sld [smem:[#allocation7 + $0x181]]
    %s146 = sld [smem:[#allocation7 + $0x182]]
    %s147 = sld [smem:[#allocation7 + $0x183]]
    %s148 = sld [smem:[#allocation7 + $0x184]]
    %s149 = sld [smem:[#allocation7 + $0x185]]
    %s150 = sld [smem:[#allocation7 + $0x186]]
    %s151 = sld [smem:[#allocation7 + $0x187]]
    %s152 = sld [smem:[#allocation7 + $0x188]]
    %s153 = sld [smem:[#allocation7 + $0x189]]
    %s154 = sld [smem:[#allocation7 + $0x200]]
    %s155 = sld [smem:[#allocation7 + $0x201]]
    %s156 = sld [smem:[#allocation7 + $0x202]]
    %s157 = sld [smem:[#allocation7 + $0x203]]
    %s158 = sld [smem:[#allocation7 + $0x204]]
    %s159 = sld [smem:[#allocation7 + $0x205]]
    %s160 = sld [smem:[#allocation7 + $0x206]]
    %s161 = sld [smem:[#allocation7 + $0x207]]
    %s162 = sld [smem:[#allocation7 + $0x208]]
    %s163 = sld [smem:[#allocation7 + $0x209]]
    %s164 = sld [smem:[#allocation7 + $0x280]]
    %s165 = sld [smem:[#allocation7 + $0x281]]
    %s166 = sld [smem:[#allocation7 + $0x282]]
    %s167 = sld [smem:[#allocation7 + $0x283]]
    %s168 = sld [smem:[#allocation7 + $0x284]]
    %s169 = sld [smem:[#allocation7 + $0x285]]
    %s170 = sld [smem:[#allocation7 + $0x286]]
    %s171 = sld [smem:[#allocation7 + $0x287]]
    %s172 = sld [smem:[#allocation7 + $0x288]]
    %s173 = sld [smem:[#allocation7 + $0x289]]
    %s174 = sld [smem:[#allocation7 + $0x300]]
    %s175 = sld [smem:[#allocation7 + $0x301]]
    %s176 = sld [smem:[#allocation7 + $0x302]]
    %s177 = sld [smem:[#allocation7 + $0x303]]
    %s178 = sld [smem:[#allocation7 + $0x304]]
    %s179 = sld [smem:[#allocation7 + $0x305]]
    %s180 = sld [smem:[#allocation7 + $0x306]]
    %s181 = sld [smem:[#allocation7 + $0x307]]
    %s182 = sld [smem:[#allocation7 + $0x308]]
    %s183 = sld [smem:[#allocation7 + $0x309]]
    %s184 = sld [smem:[#allocation7 + $0x380]]
    %s185 = sld [smem:[#allocation7 + $0x381]]
    %s186 = sld [smem:[#allocation7 + $0x382]]
    %s187 = sld [smem:[#allocation7 + $0x383]]
    %s188 = sld [smem:[#allocation7 + $0x384]]
    %s189 = sld [smem:[#allocation7 + $0x385]]
    %s190 = sld [smem:[#allocation7 + $0x386]]
    %s191 = sld [smem:[#allocation7 + $0x387]]
    %s192 = sld [smem:[#allocation7 + $0x388]]
    %s193 = sld [smem:[#allocation7 + $0x389]]
    %s194 = sld [smem:[#allocation8]]
    %s195 = sld [smem:[#allocation8 + $0x1]]
    %s196 = sld [smem:[#allocation8 + $0x2]]
    %s197 = sld [smem:[#allocation8 + $0x3]]
    %s198 = sld [smem:[#allocation8 + $0x4]]
    %s199 = sld [smem:[#allocation8 + $0x5]]
    %s200 = sld [smem:[#allocation8 + $0x6]]
    %s201 = sld [smem:[#allocation8 + $0x7]]
    %s202 = sld [smem:[#allocation9]]
    %s203 = sld [smem:[#allocation9 + $0x1]]
    %s204 = sld [smem:[#allocation9 + $0x2]]
    %s205 = sld [smem:[#allocation9 + $0x3]]
    %s206 = sld [smem:[#allocation9 + $0x4]]
    %s207 = sld [smem:[#allocation9 + $0x5]]
    %s208 = sld [smem:[#allocation9 + $0x6]]
    %s209 = sld [smem:[#allocation9 + $0x7]]
    %s210 = sld [smem:[#allocation9 + $0x80]]
    %s211 = sld [smem:[#allocation9 + $0x81]]
    %s212 = sld [smem:[#allocation9 + $0x82]]
    %s213 = sld [smem:[#allocation9 + $0x83]]
    %s214 = sld [smem:[#allocation9 + $0x84]]
    %s215 = sld [smem:[#allocation9 + $0x85]]
    %s216 = sld [smem:[#allocation9 + $0x86]]
    %s217 = sld [smem:[#allocation9 + $0x87]]
    %s218 = sld [smem:[#allocation9 + $0x100]]
    %s219 = sld [smem:[#allocation9 + $0x101]]
    %s220 = sld [smem:[#allocation9 + $0x102]]
    %s221 = sld [smem:[#allocation9 + $0x103]]
    %s222 = sld [smem:[#allocation9 + $0x104]]
    %s223 = sld [smem:[#allocation9 + $0x105]]
    %s224 = sld [smem:[#allocation9 + $0x106]]
    %s225 = sld [smem:[#allocation9 + $0x107]]
    %s226 = sld [smem:[#allocation9 + $0x180]]
    %s227 = sld [smem:[#allocation9 + $0x181]]
    %s228 = sld [smem:[#allocation9 + $0x182]]
    %s229 = sld [smem:[#allocation9 + $0x183]]
    %s230 = sld [smem:[#allocation9 + $0x184]]
    %s231 = sld [smem:[#allocation9 + $0x185]]
    %s232 = sld [smem:[#allocation9 + $0x186]]
    %s233 = sld [smem:[#allocation9 + $0x187]]
    %s234 = sld [smem:[#allocation11]]
    %s235 = sld [smem:[#allocation11 + $0x1]]
    %s236 = sld [smem:[#allocation11 + $0x2]]
    %s237 = sld [smem:[#allocation11 + $0x3]]
    %s238 = sld [smem:[#allocation12]]
    %s239 = sld [smem:[#allocation12 + $0x1]]
    %s240 = sld [smem:[#allocation12 + $0x2]]
    %s241 = sld [smem:[#allocation12 + $0x3]]
    %s242 = sld [smem:[#allocation12 + $0x80]]
    %s243 = sld [smem:[#allocation12 + $0x81]]
    %s244 = sld [smem:[#allocation12 + $0x82]]
    %s245 = sld [smem:[#allocation12 + $0x83]]
    %s246 = sld [smem:[#allocation14]]
    %s247 = sld [smem:[#allocation14 + $0x1]]
    %v248 = vld [vmem:[#allocation2] sm:$0xf]
    %v249 = vld [vmem:[#allocation2 + $0x4] sm:$0xf]
    %v250 = vunpack.c.l.bf16 %v248
    %v251 = vunpack.c.l.bf16 %v249
    %s252 = sadd.s32 0, 2
    %s253 = smul.addr %s252, 4
    %s254 = scalar_lea.vmem [#allocation2], %s253
    %v255 = vld [vmem:[%s254] sm:$0xf]
    %v256 = vld [vmem:[%s254 + $0x4] sm:$0xf]
    %v257 = vunpack.c.l.bf16 %v255
    %v258 = vunpack.c.l.bf16 %v256
    %s259 = sadd.s32 0, 4
    %s260 = smul.addr %s259, 4
    %s261 = scalar_lea.vmem [#allocation2], %s260
    %v262 = vld [vmem:[%s261] sm:$0xf]
    %v263 = vld [vmem:[%s261 + $0x4] sm:$0xf]
    %v264 = vunpack.c.l.bf16 %v262
    %v265 = vunpack.c.l.bf16 %v263
    %s266 = sadd.s32 0, 6
    %s267 = smul.addr %s266, 4
    %s268 = scalar_lea.vmem [#allocation2], %s267
    %v269 = vld [vmem:[%s268] sm:$0xf]
    %v270 = vld [vmem:[%s268 + $0x4] sm:$0xf]
    %v271 = vunpack.c.l.bf16 %v269
    %v272 = vunpack.c.l.bf16 %v270
    %s273 = sadd.s32 0, 8
    %s274 = smul.addr %s273, 4
    %s275 = scalar_lea.vmem [#allocation2], %s274
    %v276 = vld [vmem:[%s275] sm:$0xf]
    %v277 = vld [vmem:[%s275 + $0x4] sm:$0xf]
    %v278 = vunpack.c.l.bf16 %v276
    %v279 = vunpack.c.l.bf16 %v277
    %s280 = sadd.s32 0, 10
    %s281 = smul.addr %s280, 4
    %s282 = scalar_lea.vmem [#allocation2], %s281
    %v283 = vld [vmem:[%s282] sm:$0xf]
    %v284 = vld [vmem:[%s282 + $0x4] sm:$0xf]
    %v285 = vunpack.c.l.bf16 %v283
    %v286 = vunpack.c.l.bf16 %v284
    %s287 = sadd.s32 0, 12
    %s288 = smul.addr %s287, 4
    %s289 = scalar_lea.vmem [#allocation2], %s288
    %v290 = vld [vmem:[%s289] sm:$0xf]
    %v291 = vld [vmem:[%s289 + $0x4] sm:$0xf]
    %v292 = vunpack.c.l.bf16 %v290
    %v293 = vunpack.c.l.bf16 %v291
    %s294 = sadd.s32 0, 14
    %s295 = smul.addr %s294, 4
    %s296 = scalar_lea.vmem [#allocation2], %s295
    %v297 = vld [vmem:[%s296] sm:$0xf]
    %v298 = vld [vmem:[%s296 + $0x4] sm:$0xf]
    %v299 = vunpack.c.l.bf16 %v297
    %v300 = vunpack.c.l.bf16 %v298
    %s301 = sadd.s32 0, 16
    %s302 = smul.addr %s301, 4
    %s303 = scalar_lea.vmem [#allocation2], %s302
    %v304 = vld [vmem:[%s303] sm:$0xf]
    %v305 = vld [vmem:[%s303 + $0x4] sm:$0xf]
    %v306 = vunpack.c.l.bf16 %v304
    %v307 = vunpack.c.l.bf16 %v305
    %s308 = sadd.s32 0, 18
    %s309 = smul.addr %s308, 4
    %s310 = scalar_lea.vmem [#allocation2], %s309
    %v311 = vld [vmem:[%s310] sm:$0xf]
    %v312 = vld [vmem:[%s310 + $0x4] sm:$0xf]
    %v313 = vunpack.c.l.bf16 %v311
    %v314 = vunpack.c.l.bf16 %v312
    %v315 = vstv %s114
    %v316 = vmul.f32 %v315, %v250
    %v317 = vmul.f32 %v315, %v251
    %v318 = vstv %s115
    %v319 = vmul.f32 %v318, %v257
    %v320 = vmul.f32 %v318, %v258
    %v321 = vadd.f32 %v316, %v319
    %v322 = vadd.f32 %v317, %v320
    %v323 = vstv %s116
    %v324 = vmul.f32 %v323, %v264
    %v325 = vmul.f32 %v323, %v265
    %v326 = vadd.f32 %v321, %v324
    %v327 = vadd.f32 %v322, %v325
    %v328 = vstv %s117
    %v329 = vmul.f32 %v328, %v271
    %v330 = vmul.f32 %v328, %v272
    %v331 = vadd.f32 %v326, %v329
    %v332 = vadd.f32 %v327, %v330
    %v333 = vstv %s118
    %v334 = vmul.f32 %v333, %v278
    %v335 = vmul.f32 %v333, %v279
    %v336 = vadd.f32 %v331, %v334
    %v337 = vadd.f32 %v332, %v335
    %v338 = vstv %s119
    %v339 = vmul.f32 %v338, %v285
    %v340 = vmul.f32 %v338, %v286
    %v341 = vadd.f32 %v336, %v339
    %v342 = vadd.f32 %v337, %v340
    %v343 = vstv %s120
    %v344 = vmul.f32 %v343, %v292
    %v345 = vmul.f32 %v343, %v293
    %v346 = vadd.f32 %v341, %v344
    %v347 = vadd.f32 %v342, %v345
    %v348 = vstv %s121
    %v349 = vmul.f32 %v348, %v299
    %v350 = vmul.f32 %v348, %v300
    %v351 = vadd.f32 %v346, %v349
    %v352 = vadd.f32 %v347, %v350
    %v353 = vstv %s122
    %v354 = vmul.f32 %v353, %v306
    %v355 = vmul.f32 %v353, %v307
    %v356 = vadd.f32 %v351, %v354
    %v357 = vadd.f32 %v352, %v355
    %v358 = vstv %s123
    %v359 = vmul.f32 %v358, %v313
    %v360 = vmul.f32 %v358, %v314
    %v361 = vadd.f32 %v356, %v359
    %v362 = vadd.f32 %v357, %v360
    %v363 = vstv %s194
    %v364 = vadd.f32 %v361, %v363
    %v365 = vadd.f32 %v362, %v363
    %v366 = vmax.f32 %v364, 0.0
    %v367 = vmax.f32 %v365, 0.0
    %v368 = vstv %s124
    %v369 = vmul.f32 %v368, %v250
    %v370 = vmul.f32 %v368, %v251
    %v371 = vstv %s125
    %v372 = vmul.f32 %v371, %v257
    %v373 = vmul.f32 %v371, %v258
    %v374 = vadd.f32 %v369, %v372
    %v375 = vadd.f32 %v370, %v373
    %v376 = vstv %s126
    %v377 = vmul.f32 %v376, %v264
    %v378 = vmul.f32 %v376, %v265
    %v379 = vadd.f32 %v374, %v377
    %v380 = vadd.f32 %v375, %v378
    %v381 = vstv %s127
    %v382 = vmul.f32 %v381, %v271
    %v383 = vmul.f32 %v381, %v272
    %v384 = vadd.f32 %v379, %v382
    %v385 = vadd.f32 %v380, %v383
    %v386 = vstv %s128
    %v387 = vmul.f32 %v386, %v278
    %v388 = vmul.f32 %v386, %v279
    %v389 = vadd.f32 %v384, %v387
    %v390 = vadd.f32 %v385, %v388
    %v391 = vstv %s129
    %v392 = vmul.f32 %v391, %v285
    %v393 = vmul.f32 %v391, %v286
    %v394 = vadd.f32 %v389, %v392
    %v395 = vadd.f32 %v390, %v393
    %v396 = vstv %s130
    %v397 = vmul.f32 %v396, %v292
    %v398 = vmul.f32 %v396, %v293
    %v399 = vadd.f32 %v394, %v397
    %v400 = vadd.f32 %v395, %v398
    %v401 = vstv %s131
    %v402 = vmul.f32 %v401, %v299
    %v403 = vmul.f32 %v401, %v300
    %v404 = vadd.f32 %v399, %v402
    %v405 = vadd.f32 %v400, %v403
    %v406 = vstv %s132
    %v407 = vmul.f32 %v406, %v306
    %v408 = vmul.f32 %v406, %v307
    %v409 = vadd.f32 %v404, %v407
    %v410 = vadd.f32 %v405, %v408
    %v411 = vstv %s133
    %v412 = vmul.f32 %v411, %v313
    %v413 = vmul.f32 %v411, %v314
    %v414 = vadd.f32 %v409, %v412
    %v415 = vadd.f32 %v410, %v413
    %v416 = vstv %s195
    %v417 = vadd.f32 %v414, %v416
    %v418 = vadd.f32 %v415, %v416
    %v419 = vmax.f32 %v417, 0.0
    %v420 = vmax.f32 %v418, 0.0
    %v421 = vstv %s134
    %v422 = vmul.f32 %v421, %v250
    %v423 = vmul.f32 %v421, %v251
    %v424 = vstv %s135
    %v425 = vmul.f32 %v424, %v257
    %v426 = vmul.f32 %v424, %v258
    %v427 = vadd.f32 %v422, %v425
    %v428 = vadd.f32 %v423, %v426
    %v429 = vstv %s136
    %v430 = vmul.f32 %v429, %v264
    %v431 = vmul.f32 %v429, %v265
    %v432 = vadd.f32 %v427, %v430
    %v433 = vadd.f32 %v428, %v431
    %v434 = vstv %s137
    %v435 = vmul.f32 %v434, %v271
    %v436 = vmul.f32 %v434, %v272
    %v437 = vadd.f32 %v432, %v435
    %v438 = vadd.f32 %v433, %v436
    %v439 = vstv %s138
    %v440 = vmul.f32 %v439, %v278
    %v441 = vmul.f32 %v439, %v279
    %v442 = vadd.f32 %v437, %v440
    %v443 = vadd.f32 %v438, %v441
    %v444 = vstv %s139
    %v445 = vmul.f32 %v444, %v285
    %v446 = vmul.f32 %v444, %v286
    %v447 = vadd.f32 %v442, %v445
    %v448 = vadd.f32 %v443, %v446
    %v449 = vstv %s140
    %v450 = vmul.f32 %v449, %v292
    %v451 = vmul.f32 %v449, %v293
    %v452 = vadd.f32 %v447, %v450
    %v453 = vadd.f32 %v448, %v451
    %v454 = vstv %s141
    %v455 = vmul.f32 %v454, %v299
    %v456 = vmul.f32 %v454, %v300
    %v457 = vadd.f32 %v452, %v455
    %v458 = vadd.f32 %v453, %v456
    %v459 = vstv %s142
    %v460 = vmul.f32 %v459, %v306
    %v461 = vmul.f32 %v459, %v307
    %v462 = vadd.f32 %v457, %v460
    %v463 = vadd.f32 %v458, %v461
    %v464 = vstv %s143
    %v465 = vmul.f32 %v464, %v313
    %v466 = vmul.f32 %v464, %v314
    %v467 = vadd.f32 %v462, %v465
    %v468 = vadd.f32 %v463, %v466
    %v469 = vstv %s196
    %v470 = vadd.f32 %v467, %v469
    %v471 = vadd.f32 %v468, %v469
    %v472 = vmax.f32 %v470, 0.0
    %v473 = vmax.f32 %v471, 0.0
    %v474 = vstv %s144
    %v475 = vmul.f32 %v474, %v250
    %v476 = vmul.f32 %v474, %v251
    %v477 = vstv %s145
    %v478 = vmul.f32 %v477, %v257
    %v479 = vmul.f32 %v477, %v258
    %v480 = vadd.f32 %v475, %v478
    %v481 = vadd.f32 %v476, %v479
    %v482 = vstv %s146
    %v483 = vmul.f32 %v482, %v264
    %v484 = vmul.f32 %v482, %v265
    %v485 = vadd.f32 %v480, %v483
    %v486 = vadd.f32 %v481, %v484
    %v487 = vstv %s147
    %v488 = vmul.f32 %v487, %v271
    %v489 = vmul.f32 %v487, %v272
    %v490 = vadd.f32 %v485, %v488
    %v491 = vadd.f32 %v486, %v489
    %v492 = vstv %s148
    %v493 = vmul.f32 %v492, %v278
    %v494 = vmul.f32 %v492, %v279
    %v495 = vadd.f32 %v490, %v493
    %v496 = vadd.f32 %v491, %v494
    %v497 = vstv %s149
    %v498 = vmul.f32 %v497, %v285
    %v499 = vmul.f32 %v497, %v286
    %v500 = vadd.f32 %v495, %v498
    %v501 = vadd.f32 %v496, %v499
    %v502 = vstv %s150
    %v503 = vmul.f32 %v502, %v292
    %v504 = vmul.f32 %v502, %v293
    %v505 = vadd.f32 %v500, %v503
    %v506 = vadd.f32 %v501, %v504
    %v507 = vstv %s151
    %v508 = vmul.f32 %v507, %v299
    %v509 = vmul.f32 %v507, %v300
    %v510 = vadd.f32 %v505, %v508
    %v511 = vadd.f32 %v506, %v509
    %v512 = vstv %s152
    %v513 = vmul.f32 %v512, %v306
    %v514 = vmul.f32 %v512, %v307
    %v515 = vadd.f32 %v510, %v513
    %v516 = vadd.f32 %v511, %v514
    %v517 = vstv %s153
    %v518 = vmul.f32 %v517, %v313
    %v519 = vmul.f32 %v517, %v314
    %v520 = vadd.f32 %v515, %v518
    %v521 = vadd.f32 %v516, %v519
    %v522 = vstv %s197
    %v523 = vadd.f32 %v520, %v522
    %v524 = vadd.f32 %v521, %v522
    %v525 = vmax.f32 %v523, 0.0
    %v526 = vmax.f32 %v524, 0.0
    %v527 = vstv %s154
    %v528 = vmul.f32 %v527, %v250
    %v529 = vmul.f32 %v527, %v251
    %v530 = vstv %s155
    %v531 = vmul.f32 %v530, %v257
    %v532 = vmul.f32 %v530, %v258
    %v533 = vadd.f32 %v528, %v531
    %v534 = vadd.f32 %v529, %v532
    %v535 = vstv %s156
    %v536 = vmul.f32 %v535, %v264
    %v537 = vmul.f32 %v535, %v265
    %v538 = vadd.f32 %v533, %v536
    %v539 = vadd.f32 %v534, %v537
    %v540 = vstv %s157
    %v541 = vmul.f32 %v540, %v271
    %v542 = vmul.f32 %v540, %v272
    %v543 = vadd.f32 %v538, %v541
    %v544 = vadd.f32 %v539, %v542
    %v545 = vstv %s158
    %v546 = vmul.f32 %v545, %v278
    %v547 = vmul.f32 %v545, %v279
    %v548 = vadd.f32 %v543, %v546
    %v549 = vadd.f32 %v544, %v547
    %v550 = vstv %s159
    %v551 = vmul.f32 %v550, %v285
    %v552 = vmul.f32 %v550, %v286
    %v553 = vadd.f32 %v548, %v551
    %v554 = vadd.f32 %v549, %v552
    %v555 = vstv %s160
    %v556 = vmul.f32 %v555, %v292
    %v557 = vmul.f32 %v555, %v293
    %v558 = vadd.f32 %v553, %v556
    %v559 = vadd.f32 %v554, %v557
    %v560 = vstv %s161
    %v561 = vmul.f32 %v560, %v299
    %v562 = vmul.f32 %v560, %v300
    %v563 = vadd.f32 %v558, %v561
    %v564 = vadd.f32 %v559, %v562
    %v565 = vstv %s162
    %v566 = vmul.f32 %v565, %v306
    %v567 = vmul.f32 %v565, %v307
    %v568 = vadd.f32 %v563, %v566
    %v569 = vadd.f32 %v564, %v567
    %v570 = vstv %s163
    %v571 = vmul.f32 %v570, %v313
    %v572 = vmul.f32 %v570, %v314
    %v573 = vadd.f32 %v568, %v571
    %v574 = vadd.f32 %v569, %v572
    %v575 = vstv %s198
    %v576 = vadd.f32 %v573, %v575
    %v577 = vadd.f32 %v574, %v575
    %v578 = vmax.f32 %v576, 0.0
    %v579 = vmax.f32 %v577, 0.0
    %v580 = vstv %s164
    %v581 = vmul.f32 %v580, %v250
    %v582 = vmul.f32 %v580, %v251
    %v583 = vstv %s165
    %v584 = vmul.f32 %v583, %v257
    %v585 = vmul.f32 %v583, %v258
    %v586 = vadd.f32 %v581, %v584
    %v587 = vadd.f32 %v582, %v585
    %v588 = vstv %s166
    %v589 = vmul.f32 %v588, %v264
    %v590 = vmul.f32 %v588, %v265
    %v591 = vadd.f32 %v586, %v589
    %v592 = vadd.f32 %v587, %v590
    %v593 = vstv %s167
    %v594 = vmul.f32 %v593, %v271
    %v595 = vmul.f32 %v593, %v272
    %v596 = vadd.f32 %v591, %v594
    %v597 = vadd.f32 %v592, %v595
    %v598 = vstv %s168
    %v599 = vmul.f32 %v598, %v278
    %v600 = vmul.f32 %v598, %v279
    %v601 = vadd.f32 %v596, %v599
    %v602 = vadd.f32 %v597, %v600
    %v603 = vstv %s169
    %v604 = vmul.f32 %v603, %v285
    %v605 = vmul.f32 %v603, %v286
    %v606 = vadd.f32 %v601, %v604
    %v607 = vadd.f32 %v602, %v605
    %v608 = vstv %s170
    %v609 = vmul.f32 %v608, %v292
    %v610 = vmul.f32 %v608, %v293
    %v611 = vadd.f32 %v606, %v609
    %v612 = vadd.f32 %v607, %v610
    %v613 = vstv %s171
    %v614 = vmul.f32 %v613, %v299
    %v615 = vmul.f32 %v613, %v300
    %v616 = vadd.f32 %v611, %v614
    %v617 = vadd.f32 %v612, %v615
    %v618 = vstv %s172
    %v619 = vmul.f32 %v618, %v306
    %v620 = vmul.f32 %v618, %v307
    %v621 = vadd.f32 %v616, %v619
    %v622 = vadd.f32 %v617, %v620
    %v623 = vstv %s173
    %v624 = vmul.f32 %v623, %v313
    %v625 = vmul.f32 %v623, %v314
    %v626 = vadd.f32 %v621, %v624
    %v627 = vadd.f32 %v622, %v625
    %v628 = vstv %s199
    %v629 = vadd.f32 %v626, %v628
    %v630 = vadd.f32 %v627, %v628
    %v631 = vmax.f32 %v629, 0.0
    %v632 = vmax.f32 %v630, 0.0
    %v633 = vstv %s174
    %v634 = vmul.f32 %v633, %v250
    %v635 = vmul.f32 %v633, %v251
    %v636 = vstv %s175
    %v637 = vmul.f32 %v636, %v257
    %v638 = vmul.f32 %v636, %v258
    %v639 = vadd.f32 %v634, %v637
    %v640 = vadd.f32 %v635, %v638
    %v641 = vstv %s176
    %v642 = vmul.f32 %v641, %v264
    %v643 = vmul.f32 %v641, %v265
    %v644 = vadd.f32 %v639, %v642
    %v645 = vadd.f32 %v640, %v643
    %v646 = vstv %s177
    %v647 = vmul.f32 %v646, %v271
    %v648 = vmul.f32 %v646, %v272
    %v649 = vadd.f32 %v644, %v647
    %v650 = vadd.f32 %v645, %v648
    %v651 = vstv %s178
    %v652 = vmul.f32 %v651, %v278
    %v653 = vmul.f32 %v651, %v279
    %v654 = vadd.f32 %v649, %v652
    %v655 = vadd.f32 %v650, %v653
    %v656 = vstv %s179
    %v657 = vmul.f32 %v656, %v285
    %v658 = vmul.f32 %v656, %v286
    %v659 = vadd.f32 %v654, %v657
    %v660 = vadd.f32 %v655, %v658
    %v661 = vstv %s180
    %v662 = vmul.f32 %v661, %v292
    %v663 = vmul.f32 %v661, %v293
    %v664 = vadd.f32 %v659, %v662
    %v665 = vadd.f32 %v660, %v663
    %v666 = vstv %s181
    %v667 = vmul.f32 %v666, %v299
    %v668 = vmul.f32 %v666, %v300
    %v669 = vadd.f32 %v664, %v667
    %v670 = vadd.f32 %v665, %v668
    %v671 = vstv %s182
    %v672 = vmul.f32 %v671, %v306
    %v673 = vmul.f32 %v671, %v307
    %v674 = vadd.f32 %v669, %v672
    %v675 = vadd.f32 %v670, %v673
    %v676 = vstv %s183
    %v677 = vmul.f32 %v676, %v313
    %v678 = vmul.f32 %v676, %v314
    %v679 = vadd.f32 %v674, %v677
    %v680 = vadd.f32 %v675, %v678
    %v681 = vstv %s200
    %v682 = vadd.f32 %v679, %v681
    %v683 = vadd.f32 %v680, %v681
    %v684 = vmax.f32 %v682, 0.0
    %v685 = vmax.f32 %v683, 0.0
    %v686 = vstv %s184
    %v687 = vmul.f32 %v686, %v250
    %v688 = vmul.f32 %v686, %v251
    %v689 = vstv %s185
    %v690 = vmul.f32 %v689, %v257
    %v691 = vmul.f32 %v689, %v258
    %v692 = vadd.f32 %v687, %v690
    %v693 = vadd.f32 %v688, %v691
    %v694 = vstv %s186
    %v695 = vmul.f32 %v694, %v264
    %v696 = vmul.f32 %v694, %v265
    %v697 = vadd.f32 %v692, %v695
    %v698 = vadd.f32 %v693, %v696
    %v699 = vstv %s187
    %v700 = vmul.f32 %v699, %v271
    %v701 = vmul.f32 %v699, %v272
    %v702 = vadd.f32 %v697, %v700
    %v703 = vadd.f32 %v698, %v701
    %v704 = vstv %s188
    %v705 = vmul.f32 %v704, %v278
    %v706 = vmul.f32 %v704, %v279
    %v707 = vadd.f32 %v702, %v705
    %v708 = vadd.f32 %v703, %v706
    %v709 = vstv %s189
    %v710 = vmul.f32 %v709, %v285
    %v711 = vmul.f32 %v709, %v286
    %v712 = vadd.f32 %v707, %v710
    %v713 = vadd.f32 %v708, %v711
    %v714 = vstv %s190
    %v715 = vmul.f32 %v714, %v292
    %v716 = vmul.f32 %v714, %v293
    %v717 = vadd.f32 %v712, %v715
    %v718 = vadd.f32 %v713, %v716
    %v719 = vstv %s191
    %v720 = vmul.f32 %v719, %v299
    %v721 = vmul.f32 %v719, %v300
    %v722 = vadd.f32 %v717, %v720
    %v723 = vadd.f32 %v718, %v721
    %v724 = vstv %s192
    %v725 = vmul.f32 %v724, %v306
    %v726 = vmul.f32 %v724, %v307
    %v727 = vadd.f32 %v722, %v725
    %v728 = vadd.f32 %v723, %v726
    %v729 = vstv %s193
    %v730 = vmul.f32 %v729, %v313
    %v731 = vmul.f32 %v729, %v314
    %v732 = vadd.f32 %v727, %v730
    %v733 = vadd.f32 %v728, %v731
    %v734 = vstv %s201
    %v735 = vadd.f32 %v732, %v734
    %v736 = vadd.f32 %v733, %v734
    %v737 = vmax.f32 %v735, 0.0
    %v738 = vmax.f32 %v736, 0.0
    %v739 = vstv %s202
    %v740 = vmul.f32 %v739, %v366
    %v741 = vmul.f32 %v739, %v367
    %v742 = vstv %s203
    %v743 = vmul.f32 %v742, %v419
    %v744 = vmul.f32 %v742, %v420
    %v745 = vadd.f32 %v740, %v743
    %v746 = vadd.f32 %v741, %v744
    %v747 = vstv %s204
    %v748 = vmul.f32 %v747, %v472
    %v749 = vmul.f32 %v747, %v473
    %v750 = vadd.f32 %v745, %v748
    %v751 = vadd.f32 %v746, %v749
    %v752 = vstv %s205
    %v753 = vmul.f32 %v752, %v525
    %v754 = vmul.f32 %v752, %v526
    %v755 = vadd.f32 %v750, %v753
    %v756 = vadd.f32 %v751, %v754
    %v757 = vstv %s206
    %v758 = vmul.f32 %v757, %v578
    %v759 = vmul.f32 %v757, %v579
    %v760 = vadd.f32 %v755, %v758
    %v761 = vadd.f32 %v756, %v759
    %v762 = vstv %s207
    %v763 = vmul.f32 %v762, %v631
    %v764 = vmul.f32 %v762, %v632
    %v765 = vadd.f32 %v760, %v763
    %v766 = vadd.f32 %v761, %v764
    %v767 = vstv %s208
    %v768 = vmul.f32 %v767, %v684
    %v769 = vmul.f32 %v767, %v685
    %v770 = vadd.f32 %v765, %v768
    %v771 = vadd.f32 %v766, %v769
    %v772 = vstv %s209
    %v773 = vmul.f32 %v772, %v737
    %v774 = vmul.f32 %v772, %v738
    %v775 = vadd.f32 %v770, %v773
    %v776 = vadd.f32 %v771, %v774
    %v777 = vstv %s234
    %v778 = vadd.f32 %v775, %v777
    %v779 = vadd.f32 %v776, %v777
    %v780 = vmax.f32 %v778, 0.0
    %v781 = vmax.f32 %v779, 0.0
    %v782 = vstv %s210
    %v783 = vmul.f32 %v782, %v366
    %v784 = vmul.f32 %v782, %v367
    %v785 = vstv %s211
    %v786 = vmul.f32 %v785, %v419
    %v787 = vmul.f32 %v785, %v420
    %v788 = vadd.f32 %v783, %v786
    %v789 = vadd.f32 %v784, %v787
    %v790 = vstv %s212
    %v791 = vmul.f32 %v790, %v472
    %v792 = vmul.f32 %v790, %v473
    %v793 = vadd.f32 %v788, %v791
    %v794 = vadd.f32 %v789, %v792
    %v795 = vstv %s213
    %v796 = vmul.f32 %v795, %v525
    %v797 = vmul.f32 %v795, %v526
    %v798 = vadd.f32 %v793, %v796
    %v799 = vadd.f32 %v794, %v797
    %v800 = vstv %s214
    %v801 = vmul.f32 %v800, %v578
    %v802 = vmul.f32 %v800, %v579
    %v803 = vadd.f32 %v798, %v801
    %v804 = vadd.f32 %v799, %v802
    %v805 = vstv %s215
    %v806 = vmul.f32 %v805, %v631
    %v807 = vmul.f32 %v805, %v632
    %v808 = vadd.f32 %v803, %v806
    %v809 = vadd.f32 %v804, %v807
    %v810 = vstv %s216
    %v811 = vmul.f32 %v810, %v684
    %v812 = vmul.f32 %v810, %v685
    %v813 = vadd.f32 %v808, %v811
    %v814 = vadd.f32 %v809, %v812
    %v815 = vstv %s217
    %v816 = vmul.f32 %v815, %v737
    %v817 = vmul.f32 %v815, %v738
    %v818 = vadd.f32 %v813, %v816
    %v819 = vadd.f32 %v814, %v817
    %v820 = vstv %s235
    %v821 = vadd.f32 %v818, %v820
    %v822 = vadd.f32 %v819, %v820
    %v823 = vmax.f32 %v821, 0.0
    %v824 = vmax.f32 %v822, 0.0
    %v825 = vstv %s218
    %v826 = vmul.f32 %v825, %v366
    %v827 = vmul.f32 %v825, %v367
    %v828 = vstv %s219
    %v829 = vmul.f32 %v828, %v419
    %v830 = vmul.f32 %v828, %v420
    %v831 = vadd.f32 %v826, %v829
    %v832 = vadd.f32 %v827, %v830
    %v833 = vstv %s220
    %v834 = vmul.f32 %v833, %v472
    %v835 = vmul.f32 %v833, %v473
    %v836 = vadd.f32 %v831, %v834
    %v837 = vadd.f32 %v832, %v835
    %v838 = vstv %s221
    %v839 = vmul.f32 %v838, %v525
    %v840 = vmul.f32 %v838, %v526
    %v841 = vadd.f32 %v836, %v839
    %v842 = vadd.f32 %v837, %v840
    %v843 = vstv %s222
    %v844 = vmul.f32 %v843, %v578
    %v845 = vmul.f32 %v843, %v579
    %v846 = vadd.f32 %v841, %v844
    %v847 = vadd.f32 %v842, %v845
    %v848 = vstv %s223
    %v849 = vmul.f32 %v848, %v631
    %v850 = vmul.f32 %v848, %v632
    %v851 = vadd.f32 %v846, %v849
    %v852 = vadd.f32 %v847, %v850
    %v853 = vstv %s224
    %v854 = vmul.f32 %v853, %v684
    %v855 = vmul.f32 %v853, %v685
    %v856 = vadd.f32 %v851, %v854
    %v857 = vadd.f32 %v852, %v855
    %v858 = vstv %s225
    %v859 = vmul.f32 %v858, %v737
    %v860 = vmul.f32 %v858, %v738
    %v861 = vadd.f32 %v856, %v859
    %v862 = vadd.f32 %v857, %v860
    %v863 = vstv %s236
    %v864 = vadd.f32 %v861, %v863
    %v865 = vadd.f32 %v862, %v863
    %v866 = vmax.f32 %v864, 0.0
    %v867 = vmax.f32 %v865, 0.0
    %v868 = vstv %s226
    %v869 = vmul.f32 %v868, %v366
    %v870 = vmul.f32 %v868, %v367
    %v871 = vstv %s227
    %v872 = vmul.f32 %v871, %v419
    %v873 = vmul.f32 %v871, %v420
    %v874 = vadd.f32 %v869, %v872
    %v875 = vadd.f32 %v870, %v873
    %v876 = vstv %s228
    %v877 = vmul.f32 %v876, %v472
    %v878 = vmul.f32 %v876, %v473
    %v879 = vadd.f32 %v874, %v877
    %v880 = vadd.f32 %v875, %v878
    %v881 = vstv %s229
    %v882 = vmul.f32 %v881, %v525
    %v883 = vmul.f32 %v881, %v526
    %v884 = vadd.f32 %v879, %v882
    %v885 = vadd.f32 %v880, %v883
    %v886 = vstv %s230
    %v887 = vmul.f32 %v886, %v578
    %v888 = vmul.f32 %v886, %v579
    %v889 = vadd.f32 %v884, %v887
    %v890 = vadd.f32 %v885, %v888
    %v891 = vstv %s231
    %v892 = vmul.f32 %v891, %v631
    %v893 = vmul.f32 %v891, %v632
    %v894 = vadd.f32 %v889, %v892
    %v895 = vadd.f32 %v890, %v893
    %v896 = vstv %s232
    %v897 = vmul.f32 %v896, %v684
    %v898 = vmul.f32 %v896, %v685
    %v899 = vadd.f32 %v894, %v897
    %v900 = vadd.f32 %v895, %v898
    %v901 = vstv %s233
    %v902 = vmul.f32 %v901, %v737
    %v903 = vmul.f32 %v901, %v738
    %v904 = vadd.f32 %v899, %v902
    %v905 = vadd.f32 %v900, %v903
    %v906 = vstv %s237
    %v907 = vadd.f32 %v904, %v906
    %v908 = vadd.f32 %v905, %v906
    %v909 = vmax.f32 %v907, 0.0
    %v910 = vmax.f32 %v908, 0.0
    %v911 = vstv %s238
    %v912 = vmul.f32 %v911, %v780
    %v913 = vmul.f32 %v911, %v781
    %v914 = vstv %s239
    %v915 = vmul.f32 %v914, %v823
    %v916 = vmul.f32 %v914, %v824
    %v917 = vadd.f32 %v912, %v915
    %v918 = vadd.f32 %v913, %v916
    %v919 = vstv %s240
    %v920 = vmul.f32 %v919, %v866
    %v921 = vmul.f32 %v919, %v867
    %v922 = vadd.f32 %v917, %v920
    %v923 = vadd.f32 %v918, %v921
    %v924 = vstv %s241
    %v925 = vmul.f32 %v924, %v909
    %v926 = vmul.f32 %v924, %v910
    %v927 = vadd.f32 %v922, %v925
    %v928 = vadd.f32 %v923, %v926
    %v929 = vstv %s246
    %v930 = vadd.f32 %v927, %v929
    %v931 = vadd.f32 %v928, %v929
    %932 = vst [vmem:[#allocation15] sm:$0xff] %v930
    %933 = vst [vmem:[#allocation15 + $0x8] sm:$0xff] %v931
    %v934 = vstv %s242
    %v935 = vmul.f32 %v934, %v780
    %v936 = vmul.f32 %v934, %v781
    %v937 = vstv %s243
    %v938 = vmul.f32 %v937, %v823
    %v939 = vmul.f32 %v937, %v824
    %v940 = vadd.f32 %v935, %v938
    %v941 = vadd.f32 %v936, %v939
    %v942 = vstv %s244
    %v943 = vmul.f32 %v942, %v866
    %v944 = vmul.f32 %v942, %v867
    %v945 = vadd.f32 %v940, %v943
    %v946 = vadd.f32 %v941, %v944
    %v947 = vstv %s245
    %v948 = vmul.f32 %v947, %v909
    %v949 = vmul.f32 %v947, %v910
    %v950 = vadd.f32 %v945, %v948
    %v951 = vadd.f32 %v946, %v949
    %v952 = vstv %s247
    %v953 = vadd.f32 %v950, %v952
    %v954 = vadd.f32 %v951, %v952
    %s955 = sadd.s32 0, 16
    %s956 = scalar_lea.vmem [#allocation15], %s955
    %957 = vst [vmem:[%s956] sm:$0xff] %v953
    %958 = vst [vmem:[%s956 + $0x8] sm:$0xff] %v954
    // Predicated region
    $region58: #{tpu_custom_call.1} parent=1 // pred_check
      _
    $region59: #{tpu_custom_call.1} parent=1 // pred_check_branch
      %960 = sbr.rel (0) target = $region61
    $region60: #{tpu_custom_call.1} parent=1 // pred_region
      %962 = vsyncadd [#allocation4], 0
      %s963 = sshll.u32 [#allocation15], 4
      %s964 = int_to_ptr.vmem [resolvable:$true] %s963
      %s965 = sshll.u32 %s7, 4
      %s966 = int_to_ptr.hbm [resolvable:$true] %s965
      %971 = dma.vmem_to_hbm [thread:$0]  %s964, 512, %s966, [#allocation4], 128, 128, 8
    $region61: #{tpu_custom_call.1} parent=1 // pred_fallthru
      _
    // Predicated region
    $region62: #{tpu_custom_call.1} parent=1 // pred_check
      _
    $region63: #{tpu_custom_call.1} parent=1 // pred_check_branch
      %973 = sbr.rel (0) target = $region65
    $region64: #{tpu_custom_call.1} parent=1 // pred_region
      %975 = dma.done [#allocation4], 512
    $region65: #{tpu_custom_call.1} parent=1 // pred_fallthru
      _
    %976 = vsyncpa [#allocation3], 1
    %977 = vsyncpa [#allocation4], 1
    %978 = vsyncpa [#allocation5], 1
    %979 = vsyncpa [#allocation10], 1
    %980 = vsyncpa [#allocation6], 1
    %981 = vsyncpa [#allocation13], 1

</llo_original>
